<compile_context>
chip_gen: v7x
topology: tpu7x:2x2x1
jax: 0.10.0
libtpu: 0.0.40
codegen_flags: <defaults>
</compile_context>

<pallas_src>
import functools

import jax
import jax.numpy as jnp
from jax.experimental import pallas as pl
from jax.experimental.pallas import tpu as pltpu


def _round_up(x, m):
    return (x + m - 1) // m * m


def _choose_tile(dim, pref):
    """Return (tile, padded_dim): full dim if it is small, else `pref` (pad up)."""
    if dim <= pref:
        return dim, dim
    return pref, _round_up(dim, pref)


# ----------------------------- kernel -------------------------------------- #

def _pool_matmul_kernel(t_ref, x_ref, o_ref, acc_ref):
    # t_ref: (TM, TK)  x_ref: (TK, TN)  o_ref: (TM, TN)  acc_ref: (TM, TN) f32
    @pl.when(pl.program_id(2) == 0)
    def _init():
        acc_ref[...] = jnp.zeros_like(acc_ref)

    acc_ref[...] += jnp.dot(t_ref[...], x_ref[...],
                            preferred_element_type=jnp.float32)

    @pl.when(pl.program_id(2) == pl.num_programs(2) - 1)
    def _store():
        o_ref[...] = acc_ref[...].astype(o_ref.dtype)


# ----------------------------- wrapper -------------------------------------- #

@functools.partial(jax.jit, static_argnames=("tm", "tk", "tn"))
def spiral_pool(x, transform, *, tm=256, tk=512, tn=512):
    """pool_bvc: x (B, V_in, C), transform (V_out, V_in) -> (B, V_out, C)."""
    B, V_in, C = x.shape
    V_out = transform.shape[0]
    N = B * C

    # Fold batch into the lane/N dimension: (B, V_in, C) -> (V_in, B*C).
    # (Wrapper-side transpose/reshape is layout plumbing only.)
    x2 = jnp.transpose(x, (1, 0, 2)).reshape(V_in, N)

    TM, Mp = _choose_tile(V_out, tm)
    TK, Kp = _choose_tile(V_in, tk)
    TN, Np = _choose_tile(N, tn)

    t_p = transform
    if (Mp, Kp) != (V_out, V_in):
        t_p = jnp.pad(transform, ((0, Mp - V_out), (0, Kp - V_in)))
    x_p = x2
    if (Kp, Np) != (V_in, N):
        x_p = jnp.pad(x2, ((0, Kp - V_in), (0, Np - N)))

    out2 = pl.pallas_call(
        _pool_matmul_kernel,
        out_shape=jax.ShapeDtypeStruct((Mp, Np), x.dtype),
        grid_spec=pltpu.PrefetchScalarGridSpec(
            num_scalar_prefetch=0,
            grid=(Mp // TM, Np // TN, Kp // TK),          # K-reduction last
            in_specs=[
                pl.BlockSpec((TM, TK), lambda i, j, k: (i, k)),
                pl.BlockSpec((TK, TN), lambda i, j, k: (k, j)),
            ],
            out_specs=pl.BlockSpec((TM, TN), lambda i, j, k: (i, j)),
            scratch_shapes=[pltpu.VMEM((TM, TN), jnp.float32)],
        ),
        compiler_params=pltpu.CompilerParams(
            dimension_semantics=("parallel", "parallel", "arbitrary"),
            vmem_limit_bytes=32 * 1024 * 1024,
        ),
    )(t_p, x_p)

    out2 = out2[:V_out, :N]                               # drop M/N padding
    return out2.reshape(V_out, B, C).transpose(1, 0, 2)   # back to (B, V_out, C)


# ----------------------------- reference ------------------------------------ #

def spiral_pool_ref(x, transform):
    return jnp.einsum("oi,bic->boc", transform, x,
                      precision=jax.lax.Precision.HIGHEST)


# ----------------------------- main ------------------------------------------ #

if __name__ == "__main__":
    key = jax.random.PRNGKey(0)
    k1, k2 = jax.random.split(key, 2)

    # Small, module-consistent shapes; vertex counts chosen so the kernel
    # exercises multi-tile M and K grids plus edge padding and output slicing.
    B = 2          # batch
    C = 4          # channels per vertex
    V_in = 528     # vertices before pooling  (pads to 2 K-tiles of 512)
    V_out = 272    # vertices after pooling   (pads to 2 M-tiles of 256)

    x = jax.random.normal(k1, (B, V_in, C), dtype=jnp.float32)
    transform = jax.random.normal(k2, (V_out, V_in), dtype=jnp.float32) * 0.1

    out = spiral_pool(x, transform)
    out = jax.block_until_ready(out)

    ref = spiral_pool_ref(x, transform)
    assert out.shape == (B, V_out, C), out.shape
    max_err = float(jnp.max(jnp.abs(out - ref)))
    assert jnp.allclose(out, ref, atol=1e-3, rtol=1e-3), max_err

    print("KERNEL_OK")
</pallas_src>

<mosaic_0001>
module attributes {stable_mosaic.version = 11 : i64} {
  func.func @_pool_matmul_kernel(%arg0: i32, %arg1: i32, %arg2: i32, %arg3: memref<256x512xf32, #tpu.memory_space<vmem>>, %arg4: memref<512x8xf32, #tpu.memory_space<vmem>>, %arg5: memref<256x8xf32, #tpu.memory_space<vmem>>, %arg6: memref<256x8xf32, #tpu.memory_space<vmem>>) attributes {dimension_semantics = [#tpu.dimension_semantics<parallel>, #tpu.dimension_semantics<parallel>, #tpu.dimension_semantics<arbitrary>], iteration_bounds = array<i64: 2, 1, 2>, scalar_prefetch = 0 : i64, scratch_operands = 1 : i64, tpu.core_type = #tpu.core_type<tc>, window_params = [{transform_indices = @transform_0, window_bounds = array<i64: 256, 512>}, {transform_indices = @transform_1, window_bounds = array<i64: 512, 8>}, {transform_indices = @transform_2, window_bounds = array<i64: 256, 8>}]} {
    %c0_i32 = arith.constant 0 : i32
    %0 = arith.cmpi eq, %arg2, %c0_i32 : i32
    %1 = arith.extui %0 : i1 to i32
    %c0_i32_0 = arith.constant 0 : i32
    %2 = arith.cmpi ne, %1, %c0_i32_0 : i32
    scf.if %2 {
      %cst_9 = arith.constant 0.000000e+00 : f32
      %12 = vector.broadcast %cst_9 : f32 to vector<256x8xf32>
      %c0_10 = arith.constant 0 : index
      %c0_11 = arith.constant 0 : index
      %13 = vector.load %arg6[%c0_10, %c0_11] : memref<256x8xf32, #tpu.memory_space<vmem>>, vector<256x8xf32>
      tpu.vector_store %arg6[%c0_10, %c0_11], %12 {strides = array<i32>} : memref<256x8xf32, #tpu.memory_space<vmem>>, vector<256x8xf32>,
    } else {
    }
    %c0 = arith.constant 0 : index
    %c0_1 = arith.constant 0 : index
    %3 = vector.load %arg6[%c0, %c0_1] : memref<256x8xf32, #tpu.memory_space<vmem>>, vector<256x8xf32>
    %c0_2 = arith.constant 0 : index
    %c0_3 = arith.constant 0 : index
    %4 = vector.load %arg3[%c0_2, %c0_3] : memref<256x512xf32, #tpu.memory_space<vmem>>, vector<256x512xf32>
    %c0_4 = arith.constant 0 : index
    %c0_5 = arith.constant 0 : index
    %5 = vector.load %arg4[%c0_4, %c0_5] : memref<512x8xf32, #tpu.memory_space<vmem>>, vector<512x8xf32>
    %cst = arith.constant dense<0.000000e+00> : vector<256x8xf32>
    %6 = tpu.matmul %4, %5, %cst {dimension_numbers = #tpu.dot_dimension_numbers<[1], [0], [0], [1], [0, 0, 1, 1], [], []>} : vector<256x512xf32>, vector<512x8xf32>, vector<256x8xf32> -> vector<256x8xf32>
    %7 = arith.addf %3, %6 : vector<256x8xf32>
    %c0_6 = arith.constant 0 : index
    %c0_7 = arith.constant 0 : index
    %8 = vector.load %arg6[%c0_6, %c0_7] : memref<256x8xf32, #tpu.memory_space<vmem>>, vector<256x8xf32>
    tpu.vector_store %arg6[%c0_6, %c0_7], %7 {strides = array<i32>} : memref<256x8xf32, #tpu.memory_space<vmem>>, vector<256x8xf32>,
    %c1_i32 = arith.constant 1 : i32
    %9 = arith.cmpi eq, %arg2, %c1_i32 : i32
    %10 = arith.extui %9 : i1 to i32
    %c0_i32_8 = arith.constant 0 : i32
    %11 = arith.cmpi ne, %10, %c0_i32_8 : i32
    scf.if %11 {
      %c0_9 = arith.constant 0 : index
      %c0_10 = arith.constant 0 : index
      %12 = vector.load %arg6[%c0_9, %c0_10] : memref<256x8xf32, #tpu.memory_space<vmem>>, vector<256x8xf32>
      %c0_11 = arith.constant 0 : index
      %c0_12 = arith.constant 0 : index
      %13 = vector.load %arg5[%c0_11, %c0_12] : memref<256x8xf32, #tpu.memory_space<vmem>>, vector<256x8xf32>
      tpu.vector_store %arg5[%c0_11, %c0_12], %12 {strides = array<i32>} : memref<256x8xf32, #tpu.memory_space<vmem>>, vector<256x8xf32>,
    } else {
    }
    return
  }
  func.func @transform_0(%arg0: i32, %arg1: i32, %arg2: i32) -> (i32, i32) {
    %c0_i32 = arith.constant 0 : i32
    return %arg0, %arg2 : i32, i32
  }
  func.func @transform_1(%arg0: i32, %arg1: i32, %arg2: i32) -> (i32, i32) {
    %c0_i32 = arith.constant 0 : i32
    return %arg2, %arg1 : i32, i32
  }
  func.func @transform_2(%arg0: i32, %arg1: i32, %arg2: i32) -> (i32, i32) {
    %c0_i32 = arith.constant 0 : i32
    return %arg0, %arg1 : i32, i32
  }
}

</mosaic_0001>

<llo_original>
// kernel: spiral_pool.1
$region0: #{spiral_pool.1}
  #allocation0 [shape = 'u32[]', space=smem, size = 0x4, offset = 0x4, fixed_abs, tag = 'smem constant byte address 0x4 - core index']
  #allocation1 [shape = 'u32[144,128]{1,0:T(1,128)}', space=vmem, size = 0x12000, scoped, tag = 'internal scratch']
  #allocation2 [shape = 'f32[256,8]{1,0:T(8,128)}', space=vmem, size = 0x20000, scoped, tag = 'scratch operand']
  %s0 = inlined_call_operand.vmem [shape: f32[512,1024], index: 0, kind: input, shape index: {}]
  %s1 = inlined_call_operand.vmem [shape: f32[1024,8], index: 1, kind: input, shape index: {}]
  %s2 = inlined_call_operand.vmem [shape: f32[512,8], index: 2, kind: output, shape index: {}]
  %s3 = sld [smem:[#allocation0]]
  $region72: #{spiral_pool.1} parent=0
    _
  %s5 = ssub.s32 1, %s3
  %s6 = scalar_select 0, %s5, %s3
  $region1: #{spiral_pool.1} parent=0
    #allocation3 [shape = 'u8[1048576]{0}', space=vmem, size = 0x100000, scoped, tag = 'input window, operand 0']
    loop: start=0, step=1, limit=6
    $region2: #{spiral_pool.1} parent=1 // loop_pre_header
      _
    $region3: #{spiral_pool.1} parent=1 // loop_header
      %s8 = sphi 0, %s12
      %p9 = scmp.ge.s32.totalorder %s8, 6
      %s15 = sphi 0, %s34
      %s16 = sphi 0, %s30
      %s17 = sphi 0, %s26
      %s18 = sphi 0, %s15
      %s19 = sphi 0, %s16
      %s20 = sphi 0, %s17
      %s21 = sphi 0, %s18
      %s22 = sphi 0, %s19
      %s23 = sphi 0, %s20
      %s39 = sphi 0, %s41
      %s42 = sphi 0, %s39
      %s43 = sphi 0, %s42
      %s59 = sphi 0, %s43
      %s67 = sphi 0, %s69
      %s70 = sphi 0, %s67
      %s71 = sphi 0, %s70
      %s87 = sphi 0, %s71
      %s95 = sphi 0, %s97
      %s98 = sphi 0, %s95
      %s99 = sphi 0, %s98
      %s115 = sphi 0, %s99
    $region4: #{spiral_pool.1} parent=1 // loop_header_branch
      %11 = sbr.rel (%p9) target = $region8
    $region5: #{spiral_pool.1} parent=1 // loop_body
      %s13 = ssub.s32 %s8, 1
      %s14 = ssub.s32 %s8, 2
      %s24 = sadd.s32 1, %s17
      %p25 = scmp.ge.s32.totalorder %s24, 2
      %s26 = scalar_select %p25, 0, %s24
      %s27 = sadd.s32 1, %s16
      %s28 = scalar_select %p25, %s27, %s16
      %p29 = scmp.ge.s32.totalorder %s28, 1
      %s30 = scalar_select %p29, 0, %s28
      %s31 = sadd.s32 1, %s15
      %s32 = scalar_select %p29, %s31, %s15
      %p33 = scmp.ge.s32.totalorder %s32, 2
      %s34 = scalar_select %p33, 0, %s32
      %s35 = ssub.s32 %s15, %s34
      %s36 = ssub.s32 %s17, %s26
      %s37 = sor.u32 %s35, %s36
      %p38 = scmp.eq.s32.totalorder %s37, 0
      %s40 = sadd.s32 %s39, 1
      %s41 = scalar_select %p38, %s39, %s40
      %p44 = pneg %p38
      %p45 = scmp.eq.s32.totalorder %s8, 3
      %p46 = por %p44, %p45
      %p47 = scmp.ne.s32.totalorder %s39, %s42
      %p48 = scmp.eq.s32.totalorder %s8, 0
      %p49 = por %p47, %p48
      %p50 = scmp.ne.s32.totalorder %s39, %s42
      %p51 = scmp.eq.s32.totalorder %s13, 3
      %p52 = por %p50, %p51
      %p53 = scmp.ne.s32.totalorder %s42, %s43
      %p54 = scmp.eq.s32.totalorder %s13, 0
      %p55 = por %p53, %p54
      %p56 = scmp.ne.s32.totalorder %s42, %s43
      %p57 = scmp.eq.s32.totalorder %s14, 3
      %p58 = por %p56, %p57
      %p60 = scmp.ne.s32.totalorder %s43, %s59
      %p61 = scmp.eq.s32.totalorder %s14, 0
      %p62 = por %p60, %p61
      %s63 = ssub.s32 %s17, %s26
      %s64 = ssub.s32 %s16, %s30
      %s65 = sor.u32 %s63, %s64
      %p66 = scmp.eq.s32.totalorder %s65, 0
      %s68 = sadd.s32 %s67, 1
      %s69 = scalar_select %p66, %s67, %s68
      %p72 = pneg %p66
      %p73 = scmp.eq.s32.totalorder %s8, 3
      %p74 = por %p72, %p73
      %p75 = scmp.ne.s32.totalorder %s67, %s70
      %p76 = scmp.eq.s32.totalorder %s8, 0
      %p77 = por %p75, %p76
      %p78 = scmp.ne.s32.totalorder %s67, %s70
      %p79 = scmp.eq.s32.totalorder %s13, 3
      %p80 = por %p78, %p79
      %p81 = scmp.ne.s32.totalorder %s70, %s71
      %p82 = scmp.eq.s32.totalorder %s13, 0
      %p83 = por %p81, %p82
      %p84 = scmp.ne.s32.totalorder %s70, %s71
      %p85 = scmp.eq.s32.totalorder %s14, 3
      %p86 = por %p84, %p85
      %p88 = scmp.ne.s32.totalorder %s71, %s87
      %p89 = scmp.eq.s32.totalorder %s14, 0
      %p90 = por %p88, %p89
      %s91 = ssub.s32 %s15, %s34
      %s92 = ssub.s32 %s16, %s30
      %s93 = sor.u32 %s91, %s92
      %p94 = scmp.eq.s32.totalorder %s93, 0
      %s96 = sadd.s32 %s95, 1
      %s97 = scalar_select %p94, %s95, %s96
      %p100 = pneg %p94
      %p101 = scmp.eq.s32.totalorder %s8, 3
      %p102 = por %p100, %p101
      %p103 = scmp.ne.s32.totalorder %s95, %s98
      %p104 = scmp.eq.s32.totalorder %s8, 0
      %p105 = por %p103, %p104
      %p106 = scmp.ne.s32.totalorder %s95, %s98
      %p107 = scmp.eq.s32.totalorder %s13, 3
      %p108 = por %p106, %p107
      %p109 = scmp.ne.s32.totalorder %s98, %s99
      %p110 = scmp.eq.s32.totalorder %s13, 0
      %p111 = por %p109, %p110
      %p112 = scmp.ne.s32.totalorder %s98, %s99
      %p113 = scmp.eq.s32.totalorder %s14, 3
      %p114 = por %p112, %p113
      %p116 = scmp.ne.s32.totalorder %s99, %s115
      %p117 = scmp.eq.s32.totalorder %s14, 0
      %p118 = por %p116, %p117
      %p119 = scmp.le.s32.totalorder 1, %s8
      %p120 = scmp.lt.s32.totalorder %s8, 5
      %p121 = pnand %p119, %p120
      %p122 = pneg %p121
      // Predicated region
      $region9: #{spiral_pool.1} parent=5 // pred_check
        _
      $region10: #{spiral_pool.1} parent=5 // pred_check_branch
        %124 = sbr.rel (%p121) target = $region12
      $region11: #{spiral_pool.1} parent=5 // pred_region
        %s125 = ssub.s32 %s8, 1
      $region12: #{spiral_pool.1} parent=5 // pred_fallthru
        _
      %p126 = scmp.lt.s32.totalorder %s8, 4
      // Predicated region
      $region13: #{spiral_pool.1} parent=5 // pred_check
        %p127 = pneg %p126
      $region14: #{spiral_pool.1} parent=5 // pred_check_branch
        %129 = sbr.rel (%p127) target = $region16
      $region15: #{spiral_pool.1} parent=5 // pred_region
        // Predicated region
        $region17: #{spiral_pool.1} parent=15 // pred_check
          %p130 = pneg %p49
        $region18: #{spiral_pool.1} parent=15 // pred_check_branch
          %132 = sbr.rel (%p130) target = $region20
        $region19: #{spiral_pool.1} parent=15 // pred_region
          %s133 = sand.u32 %s39, 1
          %s134 = sand.u32 %s39, 1
          %s135 = smul.addr %s134, 1024
          %s136 = scalar_lea.vmem [#allocation3], %s135
          %s137 = smul.u32 32, %s15
          %s138 = smul.u32 4, %s17
          %s139 = smul.addr %s137, 8
          %s140 = sadd.s32 %s138, %s139
          %s141 = smul.addr %s140, 8
          %s142 = scalar_lea.vmem %s0, %s141
          // Predicated region
          $region21: #{spiral_pool.1} parent=19 // pred_check
            _
          $region22: #{spiral_pool.1} parent=19 // pred_check_branch
            %144 = sbr.rel (0) target = $region24
          $region23: #{spiral_pool.1} parent=19 // pred_region
            // Predicated region
            $region25: #{spiral_pool.1} parent=23 // pred_check
              _
            $region26: #{spiral_pool.1} parent=23 // pred_check_branch
              %146 = sbr.rel (0) target = $region28
            $region27: #{spiral_pool.1} parent=23 // pred_region
              loop: start=0, step=1, limit=1
              $region29: #{spiral_pool.1} parent=27 // loop_pre_header
                _
              $region30: #{spiral_pool.1} parent=27 // loop_header
                %s148 = sphi 0, %s152
                %p149 = scmp.ge.s32.totalorder %s148, 1
                %s153 = sphi %s142, %s142
                %s154 = sphi %s136, %s136
              $region31: #{spiral_pool.1} parent=27 // loop_header_branch
                %151 = sbr.rel (%p149) target = $region35
              $region32: #{spiral_pool.1} parent=27 // loop_body
                %v155 = vld [vmem:[%s153] sm:$0xff]
                %156 = vst [vmem:[%s154] sm:$0xff] %v155
                %v157 = vld [vmem:[%s153 + $0x8] sm:$0xff]
                %158 = vst [vmem:[%s154 + $0x8] sm:$0xff] %v157
                %v159 = vld [vmem:[%s153 + $0x10] sm:$0xff]
                %160 = vst [vmem:[%s154 + $0x10] sm:$0xff] %v159
                %v161 = vld [vmem:[%s153 + $0x18] sm:$0xff]
                %162 = vst [vmem:[%s154 + $0x18] sm:$0xff] %v161
                %v163 = vld [vmem:[%s153 + $0x40] sm:$0xff]
                %164 = vst [vmem:[%s154 + $0x20] sm:$0xff] %v163
                %v165 = vld [vmem:[%s153 + $0x48] sm:$0xff]
                %166 = vst [vmem:[%s154 + $0x28] sm:$0xff] %v165
                %v167 = vld [vmem:[%s153 + $0x50] sm:$0xff]
                %168 = vst [vmem:[%s154 + $0x30] sm:$0xff] %v167
                %v169 = vld [vmem:[%s153 + $0x58] sm:$0xff]
                %170 = vst [vmem:[%s154 + $0x38] sm:$0xff] %v169
                %v171 = vld [vmem:[%s153 + $0x80] sm:$0xff]
                %172 = vst [vmem:[%s154 + $0x40] sm:$0xff] %v171
                %v173 = vld [vmem:[%s153 + $0x88] sm:$0xff]
                %174 = vst [vmem:[%s154 + $0x48] sm:$0xff] %v173
                %v175 = vld [vmem:[%s153 + $0x90] sm:$0xff]
                %176 = vst [vmem:[%s154 + $0x50] sm:$0xff] %v175
                %v177 = vld [vmem:[%s153 + $0x98] sm:$0xff]
                %178 = vst [vmem:[%s154 + $0x58] sm:$0xff] %v177
                %v179 = vld [vmem:[%s153 + $0xc0] sm:$0xff]
                %180 = vst [vmem:[%s154 + $0x60] sm:$0xff] %v179
                %v181 = vld [vmem:[%s153 + $0xc8] sm:$0xff]
                %182 = vst [vmem:[%s154 + $0x68] sm:$0xff] %v181
                %v183 = vld [vmem:[%s153 + $0xd0] sm:$0xff]
                %184 = vst [vmem:[%s154 + $0x70] sm:$0xff] %v183
                %v185 = vld [vmem:[%s153 + $0xd8] sm:$0xff]
                %186 = vst [vmem:[%s154 + $0x78] sm:$0xff] %v185
                %v187 = vld [vmem:[%s153 + $0x100] sm:$0xff]
                %188 = vst [vmem:[%s154 + $0x80] sm:$0xff] %v187
                %v189 = vld [vmem:[%s153 + $0x108] sm:$0xff]
                %190 = vst [vmem:[%s154 + $0x88] sm:$0xff] %v189
                %v191 = vld [vmem:[%s153 + $0x110] sm:$0xff]
                %192 = vst [vmem:[%s154 + $0x90] sm:$0xff] %v191
                %v193 = vld [vmem:[%s153 + $0x118] sm:$0xff]
                %194 = vst [vmem:[%s154 + $0x98] sm:$0xff] %v193
                %v195 = vld [vmem:[%s153 + $0x140] sm:$0xff]
                %196 = vst [vmem:[%s154 + $0xa0] sm:$0xff] %v195
                %v197 = vld [vmem:[%s153 + $0x148] sm:$0xff]
                %198 = vst [vmem:[%s154 + $0xa8] sm:$0xff] %v197
                %v199 = vld [vmem:[%s153 + $0x150] sm:$0xff]
                %200 = vst [vmem:[%s154 + $0xb0] sm:$0xff] %v199
                %v201 = vld [vmem:[%s153 + $0x158] sm:$0xff]
                %202 = vst [vmem:[%s154 + $0xb8] sm:$0xff] %v201
                %v203 = vld [vmem:[%s153 + $0x180] sm:$0xff]
                %204 = vst [vmem:[%s154 + $0xc0] sm:$0xff] %v203
                %v205 = vld [vmem:[%s153 + $0x188] sm:$0xff]
                %206 = vst [vmem:[%s154 + $0xc8] sm:$0xff] %v205
                %v207 = vld [vmem:[%s153 + $0x190] sm:$0xff]
                %208 = vst [vmem:[%s154 + $0xd0] sm:$0xff] %v207
                %v209 = vld [vmem:[%s153 + $0x198] sm:$0xff]
                %210 = vst [vmem:[%s154 + $0xd8] sm:$0xff] %v209
                %v211 = vld [vmem:[%s153 + $0x1c0] sm:$0xff]
                %212 = vst [vmem:[%s154 + $0xe0] sm:$0xff] %v211
                %v213 = vld [vmem:[%s153 + $0x1c8] sm:$0xff]
                %214 = vst [vmem:[%s154 + $0xe8] sm:$0xff] %v213
                %v215 = vld [vmem:[%s153 + $0x1d0] sm:$0xff]
                %216 = vst [vmem:[%s154 + $0xf0] sm:$0xff] %v215
                %v217 = vld [vmem:[%s153 + $0x1d8] sm:$0xff]
                %218 = vst [vmem:[%s154 + $0xf8] sm:$0xff] %v217
                %v219 = vld [vmem:[%s153 + $0x200] sm:$0xff]
                %220 = vst [vmem:[%s154 + $0x100] sm:$0xff] %v219
                %v221 = vld [vmem:[%s153 + $0x208] sm:$0xff]
                %222 = vst [vmem:[%s154 + $0x108] sm:$0xff] %v221
                %v223 = vld [vmem:[%s153 + $0x210] sm:$0xff]
                %224 = vst [vmem:[%s154 + $0x110] sm:$0xff] %v223
                %v225 = vld [vmem:[%s153 + $0x218] sm:$0xff]
                %226 = vst [vmem:[%s154 + $0x118] sm:$0xff] %v225
                %v227 = vld [vmem:[%s153 + $0x240] sm:$0xff]
                %228 = vst [vmem:[%s154 + $0x120] sm:$0xff] %v227
                %v229 = vld [vmem:[%s153 + $0x248] sm:$0xff]
                %230 = vst [vmem:[%s154 + $0x128] sm:$0xff] %v229
                %v231 = vld [vmem:[%s153 + $0x250] sm:$0xff]
                %232 = vst [vmem:[%s154 + $0x130] sm:$0xff] %v231
                %v233 = vld [vmem:[%s153 + $0x258] sm:$0xff]
                %234 = vst [vmem:[%s154 + $0x138] sm:$0xff] %v233
                %v235 = vld [vmem:[%s153 + $0x280] sm:$0xff]
                %236 = vst [vmem:[%s154 + $0x140] sm:$0xff] %v235
                %v237 = vld [vmem:[%s153 + $0x288] sm:$0xff]
                %238 = vst [vmem:[%s154 + $0x148] sm:$0xff] %v237
                %v239 = vld [vmem:[%s153 + $0x290] sm:$0xff]
                %240 = vst [vmem:[%s154 + $0x150] sm:$0xff] %v239
                %v241 = vld [vmem:[%s153 + $0x298] sm:$0xff]
                %242 = vst [vmem:[%s154 + $0x158] sm:$0xff] %v241
                %v243 = vld [vmem:[%s153 + $0x2c0] sm:$0xff]
                %244 = vst [vmem:[%s154 + $0x160] sm:$0xff] %v243
                %v245 = vld [vmem:[%s153 + $0x2c8] sm:$0xff]
                %246 = vst [vmem:[%s154 + $0x168] sm:$0xff] %v245
                %v247 = vld [vmem:[%s153 + $0x2d0] sm:$0xff]
                %248 = vst [vmem:[%s154 + $0x170] sm:$0xff] %v247
                %v249 = vld [vmem:[%s153 + $0x2d8] sm:$0xff]
                %250 = vst [vmem:[%s154 + $0x178] sm:$0xff] %v249
                %v251 = vld [vmem:[%s153 + $0x300] sm:$0xff]
                %252 = vst [vmem:[%s154 + $0x180] sm:$0xff] %v251
                %v253 = vld [vmem:[%s153 + $0x308] sm:$0xff]
                %254 = vst [vmem:[%s154 + $0x188] sm:$0xff] %v253
                %v255 = vld [vmem:[%s153 + $0x310] sm:$0xff]
                %256 = vst [vmem:[%s154 + $0x190] sm:$0xff] %v255
                %v257 = vld [vmem:[%s153 + $0x318] sm:$0xff]
                %258 = vst [vmem:[%s154 + $0x198] sm:$0xff] %v257
                %v259 = vld [vmem:[%s153 + $0x340] sm:$0xff]
                %260 = vst [vmem:[%s154 + $0x1a0] sm:$0xff] %v259
                %v261 = vld [vmem:[%s153 + $0x348] sm:$0xff]
                %262 = vst [vmem:[%s154 + $0x1a8] sm:$0xff] %v261
                %v263 = vld [vmem:[%s153 + $0x350] sm:$0xff]
                %264 = vst [vmem:[%s154 + $0x1b0] sm:$0xff] %v263
                %v265 = vld [vmem:[%s153 + $0x358] sm:$0xff]
                %266 = vst [vmem:[%s154 + $0x1b8] sm:$0xff] %v265
                %v267 = vld [vmem:[%s153 + $0x380] sm:$0xff]
                %268 = vst [vmem:[%s154 + $0x1c0] sm:$0xff] %v267
                %v269 = vld [vmem:[%s153 + $0x388] sm:$0xff]
                %270 = vst [vmem:[%s154 + $0x1c8] sm:$0xff] %v269
                %v271 = vld [vmem:[%s153 + $0x390] sm:$0xff]
                %272 = vst [vmem:[%s154 + $0x1d0] sm:$0xff] %v271
                %v273 = vld [vmem:[%s153 + $0x398] sm:$0xff]
                %274 = vst [vmem:[%s154 + $0x1d8] sm:$0xff] %v273
                %v275 = vld [vmem:[%s153 + $0x3c0] sm:$0xff]
                %276 = vst [vmem:[%s154 + $0x1e0] sm:$0xff] %v275
                %v277 = vld [vmem:[%s153 + $0x3c8] sm:$0xff]
                %278 = vst [vmem:[%s154 + $0x1e8] sm:$0xff] %v277
                %v279 = vld [vmem:[%s153 + $0x3d0] sm:$0xff]
                %280 = vst [vmem:[%s154 + $0x1f0] sm:$0xff] %v279
                %v281 = vld [vmem:[%s153 + $0x3d8] sm:$0xff]
                %282 = vst [vmem:[%s154 + $0x1f8] sm:$0xff] %v281
                %v283 = vld [vmem:[%s153 + $0x400] sm:$0xff]
                %284 = vst [vmem:[%s154 + $0x200] sm:$0xff] %v283
                %v285 = vld [vmem:[%s153 + $0x408] sm:$0xff]
                %286 = vst [vmem:[%s154 + $0x208] sm:$0xff] %v285
                %v287 = vld [vmem:[%s153 + $0x410] sm:$0xff]
                %288 = vst [vmem:[%s154 + $0x210] sm:$0xff] %v287
                %v289 = vld [vmem:[%s153 + $0x418] sm:$0xff]
                %290 = vst [vmem:[%s154 + $0x218] sm:$0xff] %v289
                %v291 = vld [vmem:[%s153 + $0x440] sm:$0xff]
                %292 = vst [vmem:[%s154 + $0x220] sm:$0xff] %v291
                %v293 = vld [vmem:[%s153 + $0x448] sm:$0xff]
                %294 = vst [vmem:[%s154 + $0x228] sm:$0xff] %v293
                %v295 = vld [vmem:[%s153 + $0x450] sm:$0xff]
                %296 = vst [vmem:[%s154 + $0x230] sm:$0xff] %v295
                %v297 = vld [vmem:[%s153 + $0x458] sm:$0xff]
                %298 = vst [vmem:[%s154 + $0x238] sm:$0xff] %v297
                %v299 = vld [vmem:[%s153 + $0x480] sm:$0xff]
                %300 = vst [vmem:[%s154 + $0x240] sm:$0xff] %v299
                %v301 = vld [vmem:[%s153 + $0x488] sm:$0xff]
                %302 = vst [vmem:[%s154 + $0x248] sm:$0xff] %v301
                %v303 = vld [vmem:[%s153 + $0x490] sm:$0xff]
                %304 = vst [vmem:[%s154 + $0x250] sm:$0xff] %v303
                %v305 = vld [vmem:[%s153 + $0x498] sm:$0xff]
                %306 = vst [vmem:[%s154 + $0x258] sm:$0xff] %v305
                %v307 = vld [vmem:[%s153 + $0x4c0] sm:$0xff]
                %308 = vst [vmem:[%s154 + $0x260] sm:$0xff] %v307
                %v309 = vld [vmem:[%s153 + $0x4c8] sm:$0xff]
                %310 = vst [vmem:[%s154 + $0x268] sm:$0xff] %v309
                %v311 = vld [vmem:[%s153 + $0x4d0] sm:$0xff]
                %312 = vst [vmem:[%s154 + $0x270] sm:$0xff] %v311
                %v313 = vld [vmem:[%s153 + $0x4d8] sm:$0xff]
                %314 = vst [vmem:[%s154 + $0x278] sm:$0xff] %v313
                %v315 = vld [vmem:[%s153 + $0x500] sm:$0xff]
                %316 = vst [vmem:[%s154 + $0x280] sm:$0xff] %v315
                %v317 = vld [vmem:[%s153 + $0x508] sm:$0xff]
                %318 = vst [vmem:[%s154 + $0x288] sm:$0xff] %v317
                %v319 = vld [vmem:[%s153 + $0x510] sm:$0xff]
                %320 = vst [vmem:[%s154 + $0x290] sm:$0xff] %v319
                %v321 = vld [vmem:[%s153 + $0x518] sm:$0xff]
                %322 = vst [vmem:[%s154 + $0x298] sm:$0xff] %v321
                %v323 = vld [vmem:[%s153 + $0x540] sm:$0xff]
                %324 = vst [vmem:[%s154 + $0x2a0] sm:$0xff] %v323
                %v325 = vld [vmem:[%s153 + $0x548] sm:$0xff]
                %326 = vst [vmem:[%s154 + $0x2a8] sm:$0xff] %v325
                %v327 = vld [vmem:[%s153 + $0x550] sm:$0xff]
                %328 = vst [vmem:[%s154 + $0x2b0] sm:$0xff] %v327
                %v329 = vld [vmem:[%s153 + $0x558] sm:$0xff]
                %330 = vst [vmem:[%s154 + $0x2b8] sm:$0xff] %v329
                %v331 = vld [vmem:[%s153 + $0x580] sm:$0xff]
                %332 = vst [vmem:[%s154 + $0x2c0] sm:$0xff] %v331
                %v333 = vld [vmem:[%s153 + $0x588] sm:$0xff]
                %334 = vst [vmem:[%s154 + $0x2c8] sm:$0xff] %v333
                %v335 = vld [vmem:[%s153 + $0x590] sm:$0xff]
                %336 = vst [vmem:[%s154 + $0x2d0] sm:$0xff] %v335
                %v337 = vld [vmem:[%s153 + $0x598] sm:$0xff]
                %338 = vst [vmem:[%s154 + $0x2d8] sm:$0xff] %v337
                %v339 = vld [vmem:[%s153 + $0x5c0] sm:$0xff]
                %340 = vst [vmem:[%s154 + $0x2e0] sm:$0xff] %v339
                %v341 = vld [vmem:[%s153 + $0x5c8] sm:$0xff]
                %342 = vst [vmem:[%s154 + $0x2e8] sm:$0xff] %v341
                %v343 = vld [vmem:[%s153 + $0x5d0] sm:$0xff]
                %344 = vst [vmem:[%s154 + $0x2f0] sm:$0xff] %v343
                %v345 = vld [vmem:[%s153 + $0x5d8] sm:$0xff]
                %346 = vst [vmem:[%s154 + $0x2f8] sm:$0xff] %v345
                %v347 = vld [vmem:[%s153 + $0x600] sm:$0xff]
                %348 = vst [vmem:[%s154 + $0x300] sm:$0xff] %v347
                %v349 = vld [vmem:[%s153 + $0x608] sm:$0xff]
                %350 = vst [vmem:[%s154 + $0x308] sm:$0xff] %v349
                %v351 = vld [vmem:[%s153 + $0x610] sm:$0xff]
                %352 = vst [vmem:[%s154 + $0x310] sm:$0xff] %v351
                %v353 = vld [vmem:[%s153 + $0x618] sm:$0xff]
                %354 = vst [vmem:[%s154 + $0x318] sm:$0xff] %v353
                %v355 = vld [vmem:[%s153 + $0x640] sm:$0xff]
                %356 = vst [vmem:[%s154 + $0x320] sm:$0xff] %v355
                %v357 = vld [vmem:[%s153 + $0x648] sm:$0xff]
                %358 = vst [vmem:[%s154 + $0x328] sm:$0xff] %v357
                %v359 = vld [vmem:[%s153 + $0x650] sm:$0xff]
                %360 = vst [vmem:[%s154 + $0x330] sm:$0xff] %v359
                %v361 = vld [vmem:[%s153 + $0x658] sm:$0xff]
                %362 = vst [vmem:[%s154 + $0x338] sm:$0xff] %v361
                %v363 = vld [vmem:[%s153 + $0x680] sm:$0xff]
                %364 = vst [vmem:[%s154 + $0x340] sm:$0xff] %v363
                %v365 = vld [vmem:[%s153 + $0x688] sm:$0xff]
                %366 = vst [vmem:[%s154 + $0x348] sm:$0xff] %v365
                %v367 = vld [vmem:[%s153 + $0x690] sm:$0xff]
                %368 = vst [vmem:[%s154 + $0x350] sm:$0xff] %v367
                %v369 = vld [vmem:[%s153 + $0x698] sm:$0xff]
                %370 = vst [vmem:[%s154 + $0x358] sm:$0xff] %v369
                %v371 = vld [vmem:[%s153 + $0x6c0] sm:$0xff]
                %372 = vst [vmem:[%s154 + $0x360] sm:$0xff] %v371
                %v373 = vld [vmem:[%s153 + $0x6c8] sm:$0xff]
                %374 = vst [vmem:[%s154 + $0x368] sm:$0xff] %v373
                %v375 = vld [vmem:[%s153 + $0x6d0] sm:$0xff]
                %376 = vst [vmem:[%s154 + $0x370] sm:$0xff] %v375
                %v377 = vld [vmem:[%s153 + $0x6d8] sm:$0xff]
                %378 = vst [vmem:[%s154 + $0x378] sm:$0xff] %v377
                %v379 = vld [vmem:[%s153 + $0x700] sm:$0xff]
                %380 = vst [vmem:[%s154 + $0x380] sm:$0xff] %v379
                %v381 = vld [vmem:[%s153 + $0x708] sm:$0xff]
                %382 = vst [vmem:[%s154 + $0x388] sm:$0xff] %v381
                %v383 = vld [vmem:[%s153 + $0x710] sm:$0xff]
                %384 = vst [vmem:[%s154 + $0x390] sm:$0xff] %v383
                %v385 = vld [vmem:[%s153 + $0x718] sm:$0xff]
                %386 = vst [vmem:[%s154 + $0x398] sm:$0xff] %v385
                %v387 = vld [vmem:[%s153 + $0x740] sm:$0xff]
                %388 = vst [vmem:[%s154 + $0x3a0] sm:$0xff] %v387
                %v389 = vld [vmem:[%s153 + $0x748] sm:$0xff]
                %390 = vst [vmem:[%s154 + $0x3a8] sm:$0xff] %v389
                %v391 = vld [vmem:[%s153 + $0x750] sm:$0xff]
                %392 = vst [vmem:[%s154 + $0x3b0] sm:$0xff] %v391
                %v393 = vld [vmem:[%s153 + $0x758] sm:$0xff]
                %394 = vst [vmem:[%s154 + $0x3b8] sm:$0xff] %v393
                %v395 = vld [vmem:[%s153 + $0x780] sm:$0xff]
                %396 = vst [vmem:[%s154 + $0x3c0] sm:$0xff] %v395
                %v397 = vld [vmem:[%s153 + $0x788] sm:$0xff]
                %398 = vst [vmem:[%s154 + $0x3c8] sm:$0xff] %v397
                %v399 = vld [vmem:[%s153 + $0x790] sm:$0xff]
                %400 = vst [vmem:[%s154 + $0x3d0] sm:$0xff] %v399
                %v401 = vld [vmem:[%s153 + $0x798] sm:$0xff]
                %402 = vst [vmem:[%s154 + $0x3d8] sm:$0xff] %v401
                %v403 = vld [vmem:[%s153 + $0x7c0] sm:$0xff]
                %404 = vst [vmem:[%s154 + $0x3e0] sm:$0xff] %v403
                %v405 = vld [vmem:[%s153 + $0x7c8] sm:$0xff]
                %406 = vst [vmem:[%s154 + $0x3e8] sm:$0xff] %v405
                %v407 = vld [vmem:[%s153 + $0x7d0] sm:$0xff]
                %408 = vst [vmem:[%s154 + $0x3f0] sm:$0xff] %v407
                %v409 = vld [vmem:[%s153 + $0x7d8] sm:$0xff]
                %410 = vst [vmem:[%s154 + $0x3f8] sm:$0xff] %v409
              $region33: #{spiral_pool.1} parent=27 // loop_footer
                %s152 = sadd.s32 1, %s148
              $region34: #{spiral_pool.1} parent=27 // loop_footer_branch
                %147 = sbr.rel target = $region30
              $region35: #{spiral_pool.1} parent=27 // loop_exit
                _
            $region28: #{spiral_pool.1} parent=23 // pred_fallthru
              _
            // Predicated region
            $region36: #{spiral_pool.1} parent=23 // pred_check
              _
            $region37: #{spiral_pool.1} parent=23 // pred_check_branch
              %412 = sbr.rel target = $region39
            $region38: #{spiral_pool.1} parent=23 // pred_region
              _
            $region39: #{spiral_pool.1} parent=23 // pred_fallthru
              _
          $region24: #{spiral_pool.1} parent=19 // pred_fallthru
            _
          %413 = vnop
        $region20: #{spiral_pool.1} parent=15 // pred_fallthru
          _
        // Predicated region
        $region40: #{spiral_pool.1} parent=15 // pred_check
          %p414 = pneg %p77
        $region41: #{spiral_pool.1} parent=15 // pred_check_branch
          %416 = sbr.rel (%p414) target = $region43
        $region42: #{spiral_pool.1} parent=15 // pred_region
          %s417 = smul.u32 64, %s17
          %p418 = scmp.lt.s32.totalorder %s417, 127
          %s419 = scalar_select %p418, %s417, 127
          %p420 = scmp.lt.s32.totalorder %s16, 0
          %s421 = scalar_select %p420, %s16, 0
          %s422 = sadd.s32 %s421, %s419
          %s423 = smul.addr %s422, 8
          %s424 = scalar_lea.vmem %s1, %s423
          %s425 = smul.u32 64, %s17
        $region43: #{spiral_pool.1} parent=15 // pred_fallthru
          _
      $region16: #{spiral_pool.1} parent=5 // pred_fallthru
        _
      %p426 = scmp.le.s32.totalorder 1, %s8
      %p427 = scmp.lt.s32.totalorder %s8, 5
      %p428 = pnand %p426, %p427
      %p429 = pneg %p428
      // Predicated region
      $region44: #{spiral_pool.1} parent=5 // pred_check
        _
      $region45: #{spiral_pool.1} parent=5 // pred_check_branch
        %431 = sbr.rel (%p428) target = $region47
      $region46: #{spiral_pool.1} parent=5 // pred_region
        %s432 = ssub.s32 %s8, 1
        %s433 = sand.u32 %s42, 1
        %s434 = sand.u32 %s42, 1
        %s435 = smul.addr %s434, 1024
        %s436 = scalar_lea.vmem [#allocation3], %s435
        // Predicated region
        $region48: #{spiral_pool.1} parent=46 // pred_check
          %p437 = pneg %p55
        $region49: #{spiral_pool.1} parent=46 // pred_check_branch
          %439 = sbr.rel (%p437) target = $region51
        $region50: #{spiral_pool.1} parent=46 // pred_region
          _
        $region51: #{spiral_pool.1} parent=46 // pred_fallthru
          _
        %s440 = sand.u32 %s42, 1
        %s441 = sand.u32 %s42, 1
        %s442 = smul.addr %s441, 1024
        %s443 = scalar_lea.vmem [#allocation3], %s442
        %p444 = pneg %p55
        %p445 = pneg %p52
        %s446 = smul.u32 64, %s20
        %p447 = scmp.lt.s32.totalorder %s446, 127
        %s448 = scalar_select %p447, %s446, 127
        %p449 = scmp.lt.s32.totalorder %s19, 0
        %s450 = scalar_select %p449, %s19, 0
        %s451 = sadd.s32 %s450, %s448
        %s452 = smul.addr %s451, 8
        %s453 = scalar_lea.vmem %s1, %s452
        %p454 = pneg %p83
        %p455 = pneg %p80
        %p456 = pneg %p111
        %p457 = pneg %p108
        %s458 = smul.u32 32, %s18
        %p459 = scmp.lt.s32.totalorder %s458, 63
        %s460 = scalar_select %p459, %s458, 63
        %p461 = scmp.lt.s32.totalorder %s19, 0
        %s462 = scalar_select %p461, %s19, 0
        %s463 = sadd.s32 %s462, %s460
        %s464 = smul.addr %s463, 8
        %s465 = scalar_lea.vmem %s2, %s464
        %s466 = smul.u32 32, %s18
        %s467 = smul.u32 4, %s20
        %s468 = smul.u32 64, %s20
        %p469 = scmp.lt.s32.totalorder %s468, 127
        %s470 = scalar_select %p469, %s468, 127
        %p471 = scmp.lt.s32.totalorder %s19, 0
        %s472 = scalar_select %p471, %s19, 0
        %s473 = sadd.s32 %s472, %s470
        %s474 = smul.addr %s473, 8
        %s475 = scalar_lea.vmem %s1, %s474
        %s476 = smul.u32 64, %s20
        %s477 = smul.u32 32, %s18
        %p478 = scmp.lt.s32.totalorder %s477, 63
        %s479 = scalar_select %p478, %s477, 63
        %p480 = scmp.lt.s32.totalorder %s19, 0
        %s481 = scalar_select %p480, %s19, 0
        %s482 = sadd.s32 %s481, %s479
        %s483 = smul.addr %s482, 8
        %s484 = scalar_lea.vmem %s2, %s483
        %s485 = smul.u32 32, %s18
        %p486 = scmp.eq.s32.totalorder %s20, 0
        // Predicated region
        $region52: #{spiral_pool.1} parent=46 // pred_check
          %p487 = pneg %p486
        $region53: #{spiral_pool.1} parent=46 // pred_check_branch
          %489 = sbr.rel (%p487) target = $region55
        $region54: #{spiral_pool.1} parent=46 // pred_region
          %vm490 = vcmask 64512
          %491 = vst.msk [vmem:[#allocation2] sm:$0xff] %vm490, 0.0
          %492 = vst.msk [vmem:[#allocation2 + $0x8] sm:$0xff] %vm490, 0.0
          %493 = vst.msk [vmem:[#allocation2 + $0x10] sm:$0xff] %vm490, 0.0
          %494 = vst.msk [vmem:[#allocation2 + $0x18] sm:$0xff] %vm490, 0.0
          %495 = vst.msk [vmem:[#allocation2 + $0x20] sm:$0xff] %vm490, 0.0
          %496 = vst.msk [vmem:[#allocation2 + $0x28] sm:$0xff] %vm490, 0.0
          %497 = vst.msk [vmem:[#allocation2 + $0x30] sm:$0xff] %vm490, 0.0
          %498 = vst.msk [vmem:[#allocation2 + $0x38] sm:$0xff] %vm490, 0.0
          %499 = vst.msk [vmem:[#allocation2 + $0x40] sm:$0xff] %vm490, 0.0
          %500 = vst.msk [vmem:[#allocation2 + $0x48] sm:$0xff] %vm490, 0.0
          %501 = vst.msk [vmem:[#allocation2 + $0x50] sm:$0xff] %vm490, 0.0
          %502 = vst.msk [vmem:[#allocation2 + $0x58] sm:$0xff] %vm490, 0.0
          %503 = vst.msk [vmem:[#allocation2 + $0x60] sm:$0xff] %vm490, 0.0
          %504 = vst.msk [vmem:[#allocation2 + $0x68] sm:$0xff] %vm490, 0.0
          %505 = vst.msk [vmem:[#allocation2 + $0x70] sm:$0xff] %vm490, 0.0
          %506 = vst.msk [vmem:[#allocation2 + $0x78] sm:$0xff] %vm490, 0.0
          %507 = vst.msk [vmem:[#allocation2 + $0x80] sm:$0xff] %vm490, 0.0
          %508 = vst.msk [vmem:[#allocation2 + $0x88] sm:$0xff] %vm490, 0.0
          %509 = vst.msk [vmem:[#allocation2 + $0x90] sm:$0xff] %vm490, 0.0
          %510 = vst.msk [vmem:[#allocation2 + $0x98] sm:$0xff] %vm490, 0.0
          %511 = vst.msk [vmem:[#allocation2 + $0xa0] sm:$0xff] %vm490, 0.0
          %512 = vst.msk [vmem:[#allocation2 + $0xa8] sm:$0xff] %vm490, 0.0
          %513 = vst.msk [vmem:[#allocation2 + $0xb0] sm:$0xff] %vm490, 0.0
          %514 = vst.msk [vmem:[#allocation2 + $0xb8] sm:$0xff] %vm490, 0.0
          %515 = vst.msk [vmem:[#allocation2 + $0xc0] sm:$0xff] %vm490, 0.0
          %516 = vst.msk [vmem:[#allocation2 + $0xc8] sm:$0xff] %vm490, 0.0
          %517 = vst.msk [vmem:[#allocation2 + $0xd0] sm:$0xff] %vm490, 0.0
          %518 = vst.msk [vmem:[#allocation2 + $0xd8] sm:$0xff] %vm490, 0.0
          %519 = vst.msk [vmem:[#allocation2 + $0xe0] sm:$0xff] %vm490, 0.0
          %520 = vst.msk [vmem:[#allocation2 + $0xe8] sm:$0xff] %vm490, 0.0
          %521 = vst.msk [vmem:[#allocation2 + $0xf0] sm:$0xff] %vm490, 0.0
          %522 = vst.msk [vmem:[#allocation2 + $0xf8] sm:$0xff] %vm490, 0.0
        $region55: #{spiral_pool.1} parent=46 // pred_fallthru
          _
        %v523 = vld [vmem:[#allocation2] sm:$0xff]
        %v524 = vld [vmem:[#allocation2 + $0x8] sm:$0xff]
        %v525 = vld [vmem:[#allocation2 + $0x10] sm:$0xff]
        %v526 = vld [vmem:[#allocation2 + $0x18] sm:$0xff]
        %v527 = vld [vmem:[#allocation2 + $0x20] sm:$0xff]
        %v528 = vld [vmem:[#allocation2 + $0x28] sm:$0xff]
        %v529 = vld [vmem:[#allocation2 + $0x30] sm:$0xff]
        %v530 = vld [vmem:[#allocation2 + $0x38] sm:$0xff]
        %v531 = vld [vmem:[#allocation2 + $0x40] sm:$0xff]
        %v532 = vld [vmem:[#allocation2 + $0x48] sm:$0xff]
        %v533 = vld [vmem:[#allocation2 + $0x50] sm:$0xff]
        %v534 = vld [vmem:[#allocation2 + $0x58] sm:$0xff]
        %v535 = vld [vmem:[#allocation2 + $0x60] sm:$0xff]
        %v536 = vld [vmem:[#allocation2 + $0x68] sm:$0xff]
        %v537 = vld [vmem:[#allocation2 + $0x70] sm:$0xff]
        %v538 = vld [vmem:[#allocation2 + $0x78] sm:$0xff]
        %v539 = vld [vmem:[#allocation2 + $0x80] sm:$0xff]
        %v540 = vld [vmem:[#allocation2 + $0x88] sm:$0xff]
        %v541 = vld [vmem:[#allocation2 + $0x90] sm:$0xff]
        %v542 = vld [vmem:[#allocation2 + $0x98] sm:$0xff]
        %v543 = vld [vmem:[#allocation2 + $0xa0] sm:$0xff]
        %v544 = vld [vmem:[#allocation2 + $0xa8] sm:$0xff]
        %v545 = vld [vmem:[#allocation2 + $0xb0] sm:$0xff]
        %v546 = vld [vmem:[#allocation2 + $0xb8] sm:$0xff]
        %v547 = vld [vmem:[#allocation2 + $0xc0] sm:$0xff]
        %v548 = vld [vmem:[#allocation2 + $0xc8] sm:$0xff]
        %v549 = vld [vmem:[#allocation2 + $0xd0] sm:$0xff]
        %v550 = vld [vmem:[#allocation2 + $0xd8] sm:$0xff]
        %v551 = vld [vmem:[#allocation2 + $0xe0] sm:$0xff]
        %v552 = vld [vmem:[#allocation2 + $0xe8] sm:$0xff]
        %v553 = vld [vmem:[#allocation2 + $0xf0] sm:$0xff]
        %v554 = vld [vmem:[#allocation2 + $0xf8] sm:$0xff]
        %v555 = vld [vmem:[%s436] sm:$0xff]
        %v556 = vld [vmem:[%s436 + $0x8] sm:$0xff]
        %v557 = vld [vmem:[%s436 + $0x10] sm:$0xff]
        %v558 = vld [vmem:[%s436 + $0x18] sm:$0xff]
        %v559 = vld [vmem:[%s436 + $0x20] sm:$0xff]
        %v560 = vld [vmem:[%s436 + $0x28] sm:$0xff]
        %v561 = vld [vmem:[%s436 + $0x30] sm:$0xff]
        %v562 = vld [vmem:[%s436 + $0x38] sm:$0xff]
        %v563 = vld [vmem:[%s436 + $0x40] sm:$0xff]
        %v564 = vld [vmem:[%s436 + $0x48] sm:$0xff]
        %v565 = vld [vmem:[%s436 + $0x50] sm:$0xff]
        %v566 = vld [vmem:[%s436 + $0x58] sm:$0xff]
        %v567 = vld [vmem:[%s436 + $0x60] sm:$0xff]
        %v568 = vld [vmem:[%s436 + $0x68] sm:$0xff]
        %v569 = vld [vmem:[%s436 + $0x70] sm:$0xff]
        %v570 = vld [vmem:[%s436 + $0x78] sm:$0xff]
        %v571 = vld [vmem:[%s436 + $0x80] sm:$0xff]
        %v572 = vld [vmem:[%s436 + $0x88] sm:$0xff]
        %v573 = vld [vmem:[%s436 + $0x90] sm:$0xff]
        %v574 = vld [vmem:[%s436 + $0x98] sm:$0xff]
        %v575 = vld [vmem:[%s436 + $0xa0] sm:$0xff]
        %v576 = vld [vmem:[%s436 + $0xa8] sm:$0xff]
        %v577 = vld [vmem:[%s436 + $0xb0] sm:$0xff]
        %v578 = vld [vmem:[%s436 + $0xb8] sm:$0xff]
        %v579 = vld [vmem:[%s436 + $0xc0] sm:$0xff]
        %v580 = vld [vmem:[%s436 + $0xc8] sm:$0xff]
        %v581 = vld [vmem:[%s436 + $0xd0] sm:$0xff]
        %v582 = vld [vmem:[%s436 + $0xd8] sm:$0xff]
        %v583 = vld [vmem:[%s436 + $0xe0] sm:$0xff]
        %v584 = vld [vmem:[%s436 + $0xe8] sm:$0xff]
        %v585 = vld [vmem:[%s436 + $0xf0] sm:$0xff]
        %v586 = vld [vmem:[%s436 + $0xf8] sm:$0xff]
        %v587 = vld [vmem:[%s436 + $0x100] sm:$0xff]
        %v588 = vld [vmem:[%s436 + $0x108] sm:$0xff]
        %v589 = vld [vmem:[%s436 + $0x110] sm:$0xff]
        %v590 = vld [vmem:[%s436 + $0x118] sm:$0xff]
        %v591 = vld [vmem:[%s436 + $0x120] sm:$0xff]
        %v592 = vld [vmem:[%s436 + $0x128] sm:$0xff]
        %v593 = vld [vmem:[%s436 + $0x130] sm:$0xff]
        %v594 = vld [vmem:[%s436 + $0x138] sm:$0xff]
        %v595 = vld [vmem:[%s436 + $0x140] sm:$0xff]
        %v596 = vld [vmem:[%s436 + $0x148] sm:$0xff]
        %v597 = vld [vmem:[%s436 + $0x150] sm:$0xff]
        %v598 = vld [vmem:[%s436 + $0x158] sm:$0xff]
        %v599 = vld [vmem:[%s436 + $0x160] sm:$0xff]
        %v600 = vld [vmem:[%s436 + $0x168] sm:$0xff]
        %v601 = vld [vmem:[%s436 + $0x170] sm:$0xff]
        %v602 = vld [vmem:[%s436 + $0x178] sm:$0xff]
        %v603 = vld [vmem:[%s436 + $0x180] sm:$0xff]
        %v604 = vld [vmem:[%s436 + $0x188] sm:$0xff]
        %v605 = vld [vmem:[%s436 + $0x190] sm:$0xff]
        %v606 = vld [vmem:[%s436 + $0x198] sm:$0xff]
        %v607 = vld [vmem:[%s436 + $0x1a0] sm:$0xff]
        %v608 = vld [vmem:[%s436 + $0x1a8] sm:$0xff]
        %v609 = vld [vmem:[%s436 + $0x1b0] sm:$0xff]
        %v610 = vld [vmem:[%s436 + $0x1b8] sm:$0xff]
        %v611 = vld [vmem:[%s436 + $0x1c0] sm:$0xff]
        %v612 = vld [vmem:[%s436 + $0x1c8] sm:$0xff]
        %v613 = vld [vmem:[%s436 + $0x1d0] sm:$0xff]
        %v614 = vld [vmem:[%s436 + $0x1d8] sm:$0xff]
        %v615 = vld [vmem:[%s436 + $0x1e0] sm:$0xff]
        %v616 = vld [vmem:[%s436 + $0x1e8] sm:$0xff]
        %v617 = vld [vmem:[%s436 + $0x1f0] sm:$0xff]
        %v618 = vld [vmem:[%s436 + $0x1f8] sm:$0xff]
        %v619 = vld [vmem:[%s436 + $0x200] sm:$0xff]
        %v620 = vld [vmem:[%s436 + $0x208] sm:$0xff]
        %v621 = vld [vmem:[%s436 + $0x210] sm:$0xff]
        %v622 = vld [vmem:[%s436 + $0x218] sm:$0xff]
        %v623 = vld [vmem:[%s436 + $0x220] sm:$0xff]
        %v624 = vld [vmem:[%s436 + $0x228] sm:$0xff]
        %v625 = vld [vmem:[%s436 + $0x230] sm:$0xff]
        %v626 = vld [vmem:[%s436 + $0x238] sm:$0xff]
        %v627 = vld [vmem:[%s436 + $0x240] sm:$0xff]
        %v628 = vld [vmem:[%s436 + $0x248] sm:$0xff]
        %v629 = vld [vmem:[%s436 + $0x250] sm:$0xff]
        %v630 = vld [vmem:[%s436 + $0x258] sm:$0xff]
        %v631 = vld [vmem:[%s436 + $0x260] sm:$0xff]
        %v632 = vld [vmem:[%s436 + $0x268] sm:$0xff]
        %v633 = vld [vmem:[%s436 + $0x270] sm:$0xff]
        %v634 = vld [vmem:[%s436 + $0x278] sm:$0xff]
        %v635 = vld [vmem:[%s436 + $0x280] sm:$0xff]
        %v636 = vld [vmem:[%s436 + $0x288] sm:$0xff]
        %v637 = vld [vmem:[%s436 + $0x290] sm:$0xff]
        %v638 = vld [vmem:[%s436 + $0x298] sm:$0xff]
        %v639 = vld [vmem:[%s436 + $0x2a0] sm:$0xff]
        %v640 = vld [vmem:[%s436 + $0x2a8] sm:$0xff]
        %v641 = vld [vmem:[%s436 + $0x2b0] sm:$0xff]
        %v642 = vld [vmem:[%s436 + $0x2b8] sm:$0xff]
        %v643 = vld [vmem:[%s436 + $0x2c0] sm:$0xff]
        %v644 = vld [vmem:[%s436 + $0x2c8] sm:$0xff]
        %v645 = vld [vmem:[%s436 + $0x2d0] sm:$0xff]
        %v646 = vld [vmem:[%s436 + $0x2d8] sm:$0xff]
        %v647 = vld [vmem:[%s436 + $0x2e0] sm:$0xff]
        %v648 = vld [vmem:[%s436 + $0x2e8] sm:$0xff]
        %v649 = vld [vmem:[%s436 + $0x2f0] sm:$0xff]
        %v650 = vld [vmem:[%s436 + $0x2f8] sm:$0xff]
        %v651 = vld [vmem:[%s436 + $0x300] sm:$0xff]
        %v652 = vld [vmem:[%s436 + $0x308] sm:$0xff]
        %v653 = vld [vmem:[%s436 + $0x310] sm:$0xff]
        %v654 = vld [vmem:[%s436 + $0x318] sm:$0xff]
        %v655 = vld [vmem:[%s436 + $0x320] sm:$0xff]
        %v656 = vld [vmem:[%s436 + $0x328] sm:$0xff]
        %v657 = vld [vmem:[%s436 + $0x330] sm:$0xff]
        %v658 = vld [vmem:[%s436 + $0x338] sm:$0xff]
        %v659 = vld [vmem:[%s436 + $0x340] sm:$0xff]
        %v660 = vld [vmem:[%s436 + $0x348] sm:$0xff]
        %v661 = vld [vmem:[%s436 + $0x350] sm:$0xff]
        %v662 = vld [vmem:[%s436 + $0x358] sm:$0xff]
        %v663 = vld [vmem:[%s436 + $0x360] sm:$0xff]
        %v664 = vld [vmem:[%s436 + $0x368] sm:$0xff]
        %v665 = vld [vmem:[%s436 + $0x370] sm:$0xff]
        %v666 = vld [vmem:[%s436 + $0x378] sm:$0xff]
        %v667 = vld [vmem:[%s436 + $0x380] sm:$0xff]
        %v668 = vld [vmem:[%s436 + $0x388] sm:$0xff]
        %v669 = vld [vmem:[%s436 + $0x390] sm:$0xff]
        %v670 = vld [vmem:[%s436 + $0x398] sm:$0xff]
        %v671 = vld [vmem:[%s436 + $0x3a0] sm:$0xff]
        %v672 = vld [vmem:[%s436 + $0x3a8] sm:$0xff]
        %v673 = vld [vmem:[%s436 + $0x3b0] sm:$0xff]
        %v674 = vld [vmem:[%s436 + $0x3b8] sm:$0xff]
        %v675 = vld [vmem:[%s436 + $0x3c0] sm:$0xff]
        %v676 = vld [vmem:[%s436 + $0x3c8] sm:$0xff]
        %v677 = vld [vmem:[%s436 + $0x3d0] sm:$0xff]
        %v678 = vld [vmem:[%s436 + $0x3d8] sm:$0xff]
        %v679 = vld [vmem:[%s436 + $0x3e0] sm:$0xff]
        %v680 = vld [vmem:[%s436 + $0x3e8] sm:$0xff]
        %v681 = vld [vmem:[%s436 + $0x3f0] sm:$0xff]
        %v682 = vld [vmem:[%s436 + $0x3f8] sm:$0xff]
        %v683 = vld [vmem:[%s475] sm:$0xff]
        %v684 = vld [vmem:[%s475 + $0x8] sm:$0xff]
        %v685 = vld [vmem:[%s475 + $0x10] sm:$0xff]
        %v686 = vld [vmem:[%s475 + $0x18] sm:$0xff]
        %v687 = vld [vmem:[%s475 + $0x20] sm:$0xff]
        %v688 = vld [vmem:[%s475 + $0x28] sm:$0xff]
        %v689 = vld [vmem:[%s475 + $0x30] sm:$0xff]
        %v690 = vld [vmem:[%s475 + $0x38] sm:$0xff]
        %v691 = vld [vmem:[%s475 + $0x40] sm:$0xff]
        %v692 = vld [vmem:[%s475 + $0x48] sm:$0xff]
        %v693 = vld [vmem:[%s475 + $0x50] sm:$0xff]
        %v694 = vld [vmem:[%s475 + $0x58] sm:$0xff]
        %v695 = vld [vmem:[%s475 + $0x60] sm:$0xff]
        %v696 = vld [vmem:[%s475 + $0x68] sm:$0xff]
        %v697 = vld [vmem:[%s475 + $0x70] sm:$0xff]
        %v698 = vld [vmem:[%s475 + $0x78] sm:$0xff]
        %v699 = vld [vmem:[%s475 + $0x80] sm:$0xff]
        %v700 = vld [vmem:[%s475 + $0x88] sm:$0xff]
        %v701 = vld [vmem:[%s475 + $0x90] sm:$0xff]
        %v702 = vld [vmem:[%s475 + $0x98] sm:$0xff]
        %v703 = vld [vmem:[%s475 + $0xa0] sm:$0xff]
        %v704 = vld [vmem:[%s475 + $0xa8] sm:$0xff]
        %v705 = vld [vmem:[%s475 + $0xb0] sm:$0xff]
        %v706 = vld [vmem:[%s475 + $0xb8] sm:$0xff]
        %v707 = vld [vmem:[%s475 + $0xc0] sm:$0xff]
        %v708 = vld [vmem:[%s475 + $0xc8] sm:$0xff]
        %v709 = vld [vmem:[%s475 + $0xd0] sm:$0xff]
        %v710 = vld [vmem:[%s475 + $0xd8] sm:$0xff]
        %v711 = vld [vmem:[%s475 + $0xe0] sm:$0xff]
        %v712 = vld [vmem:[%s475 + $0xe8] sm:$0xff]
        %v713 = vld [vmem:[%s475 + $0xf0] sm:$0xff]
        %v714 = vld [vmem:[%s475 + $0xf8] sm:$0xff]
        %v715 = vld [vmem:[%s475 + $0x100] sm:$0xff]
        %v716 = vld [vmem:[%s475 + $0x108] sm:$0xff]
        %v717 = vld [vmem:[%s475 + $0x110] sm:$0xff]
        %v718 = vld [vmem:[%s475 + $0x118] sm:$0xff]
        %v719 = vld [vmem:[%s475 + $0x120] sm:$0xff]
        %v720 = vld [vmem:[%s475 + $0x128] sm:$0xff]
        %v721 = vld [vmem:[%s475 + $0x130] sm:$0xff]
        %v722 = vld [vmem:[%s475 + $0x138] sm:$0xff]
        %v723 = vld [vmem:[%s475 + $0x140] sm:$0xff]
        %v724 = vld [vmem:[%s475 + $0x148] sm:$0xff]
        %v725 = vld [vmem:[%s475 + $0x150] sm:$0xff]
        %v726 = vld [vmem:[%s475 + $0x158] sm:$0xff]
        %v727 = vld [vmem:[%s475 + $0x160] sm:$0xff]
        %v728 = vld [vmem:[%s475 + $0x168] sm:$0xff]
        %v729 = vld [vmem:[%s475 + $0x170] sm:$0xff]
        %v730 = vld [vmem:[%s475 + $0x178] sm:$0xff]
        %v731 = vld [vmem:[%s475 + $0x180] sm:$0xff]
        %v732 = vld [vmem:[%s475 + $0x188] sm:$0xff]
        %v733 = vld [vmem:[%s475 + $0x190] sm:$0xff]
        %v734 = vld [vmem:[%s475 + $0x198] sm:$0xff]
        %v735 = vld [vmem:[%s475 + $0x1a0] sm:$0xff]
        %v736 = vld [vmem:[%s475 + $0x1a8] sm:$0xff]
        %v737 = vld [vmem:[%s475 + $0x1b0] sm:$0xff]
        %v738 = vld [vmem:[%s475 + $0x1b8] sm:$0xff]
        %v739 = vld [vmem:[%s475 + $0x1c0] sm:$0xff]
        %v740 = vld [vmem:[%s475 + $0x1c8] sm:$0xff]
        %v741 = vld [vmem:[%s475 + $0x1d0] sm:$0xff]
        %v742 = vld [vmem:[%s475 + $0x1d8] sm:$0xff]
        %v743 = vld [vmem:[%s475 + $0x1e0] sm:$0xff]
        %v744 = vld [vmem:[%s475 + $0x1e8] sm:$0xff]
        %v745 = vld [vmem:[%s475 + $0x1f0] sm:$0xff]
        %v746 = vld [vmem:[%s475 + $0x1f8] sm:$0xff]
        %747 = vmatprep.subr.mxu0 0.0
        %748 = vmatpush1.msra.mxu0 %v683
        %749 = vmatprep.subr.mxu0 0.0
        %750 = vmatpush1.msra.mxu0 %v684
        %751 = vmatprep.subr.mxu0 0.0
        %752 = vmatpush1.msra.mxu0 %v685
        %753 = vmatprep.subr.mxu0 0.0
        %754 = vmatpush1.msra.mxu0 %v686
        %755 = vmatprep.subr.mxu0 0.0
        %756 = vmatpush1.msra.mxu0 %v687
        %757 = vmatprep.subr.mxu0 0.0
        %758 = vmatpush1.msra.mxu0 %v688
        %759 = vmatprep.subr.mxu0 0.0
        %760 = vmatpush1.msra.mxu0 %v689
        %761 = vmatprep.subr.mxu0 0.0
        %762 = vmatpush1.msra.mxu0 %v690
        %763 = vmatprep.subr.mxu0 0.0
        %764 = vmatpush1.msra.mxu0 %v691
        %765 = vmatprep.subr.mxu0 0.0
        %766 = vmatpush1.msra.mxu0 %v692
        %767 = vmatprep.subr.mxu0 0.0
        %768 = vmatpush1.msra.mxu0 %v693
        %769 = vmatprep.subr.mxu0 0.0
        %770 = vmatpush1.msra.mxu0 %v694
        %771 = vmatprep.subr.mxu0 0.0
        %772 = vmatpush1.msra.mxu0 %v695
        %773 = vmatprep.subr.mxu0 0.0
        %774 = vmatpush1.msra.mxu0 %v696
        %775 = vmatprep.subr.mxu0 0.0
        %776 = vmatpush1.msra.mxu0 %v697
        %777 = vmatprep.subr.mxu0 0.0
        %778 = vmatpush1.msra.mxu0 %v698
        %779 = vmatprep.subr.mxu0 0.0
        %780 = vmatpush1.msra.mxu0 %v699
        %781 = vmatprep.subr.mxu0 0.0
        %782 = vmatpush1.msra.mxu0 %v700
        %783 = vmatprep.subr.mxu0 0.0
        %784 = vmatpush1.msra.mxu0 %v701
        %785 = vmatprep.subr.mxu0 0.0
        %786 = vmatpush1.msra.mxu0 %v702
        %787 = vmatprep.subr.mxu0 0.0
        %788 = vmatpush1.msra.mxu0 %v703
        %789 = vmatprep.subr.mxu0 0.0
        %790 = vmatpush1.msra.mxu0 %v704
        %791 = vmatprep.subr.mxu0 0.0
        %792 = vmatpush1.msra.mxu0 %v705
        %793 = vmatprep.subr.mxu0 0.0
        %794 = vmatpush1.msra.mxu0 %v706
        %795 = vmatprep.subr.mxu0 0.0
        %796 = vmatpush1.msra.mxu0 %v707
        %797 = vmatprep.subr.mxu0 0.0
        %798 = vmatpush1.msra.mxu0 %v708
        %799 = vmatprep.subr.mxu0 0.0
        %800 = vmatpush1.msra.mxu0 %v709
        %801 = vmatprep.subr.mxu0 0.0
        %802 = vmatpush1.msra.mxu0 %v710
        %803 = vmatprep.subr.mxu0 0.0
        %804 = vmatpush1.msra.mxu0 %v711
        %805 = vmatprep.subr.mxu0 0.0
        %806 = vmatpush1.msra.mxu0 %v712
        %807 = vmatprep.subr.mxu0 0.0
        %808 = vmatpush1.msra.mxu0 %v713
        %809 = vmatprep.subr.mxu0 0.0
        %810 = vmatpush1.msra.mxu0 %v714
        %811 = vmatprep.mubr.f32.mxu0 %v556
        %812 = vmatmul.mubr.f32.gmra.mrb[0].mxu0 %v555
        %v813 = vpop.f32.mrb[0].mxu0
        %v814 = vadd.f32 0.0, %v813
        %v815 = vpop.f32.mrb[0].mxu0
        %816 = vmatprep.mubr.f32.mxu0 %v560
        %817 = vmatmul.mubr.f32.gmra.mrb[0].mxu0 %v559
        %v818 = vpop.f32.mrb[0].mxu0
        %v819 = vadd.f32 0.0, %v818
        %v820 = vpop.f32.mrb[0].mxu0
        %821 = vmatprep.mubr.f32.mxu0 %v564
        %822 = vmatmul.mubr.f32.gmra.mrb[0].mxu0 %v563
        %v823 = vpop.f32.mrb[0].mxu0
        %v824 = vadd.f32 0.0, %v823
        %v825 = vpop.f32.mrb[0].mxu0
        %826 = vmatprep.mubr.f32.mxu0 %v568
        %827 = vmatmul.mubr.f32.gmra.mrb[0].mxu0 %v567
        %v828 = vpop.f32.mrb[0].mxu0
        %v829 = vadd.f32 0.0, %v828
        %v830 = vpop.f32.mrb[0].mxu0
        %831 = vmatprep.mubr.f32.mxu0 %v572
        %832 = vmatmul.mubr.f32.gmra.mrb[0].mxu0 %v571
        %v833 = vpop.f32.mrb[0].mxu0
        %v834 = vadd.f32 0.0, %v833
        %v835 = vpop.f32.mrb[0].mxu0
        %836 = vmatprep.mubr.f32.mxu0 %v576
        %837 = vmatmul.mubr.f32.gmra.mrb[0].mxu0 %v575
        %v838 = vpop.f32.mrb[0].mxu0
        %v839 = vadd.f32 0.0, %v838
        %v840 = vpop.f32.mrb[0].mxu0
        %841 = vmatprep.mubr.f32.mxu0 %v580
        %842 = vmatmul.mubr.f32.gmra.mrb[0].mxu0 %v579
        %v843 = vpop.f32.mrb[0].mxu0
        %v844 = vadd.f32 0.0, %v843
        %v845 = vpop.f32.mrb[0].mxu0
        %846 = vmatprep.mubr.f32.mxu0 %v584
        %847 = vmatmul.mubr.f32.gmra.mrb[0].mxu0 %v583
        %v848 = vpop.f32.mrb[0].mxu0
        %v849 = vadd.f32 0.0, %v848
        %v850 = vpop.f32.mrb[0].mxu0
        %851 = vmatprep.mubr.f32.mxu0 %v588
        %852 = vmatmul.mubr.f32.gmra.mrb[0].mxu0 %v587
        %v853 = vpop.f32.mrb[0].mxu0
        %v854 = vadd.f32 0.0, %v853
        %v855 = vpop.f32.mrb[0].mxu0
        %856 = vmatprep.mubr.f32.mxu0 %v592
        %857 = vmatmul.mubr.f32.gmra.mrb[0].mxu0 %v591
        %v858 = vpop.f32.mrb[0].mxu0
        %v859 = vadd.f32 0.0, %v858
        %v860 = vpop.f32.mrb[0].mxu0
        %861 = vmatprep.mubr.f32.mxu0 %v596
        %862 = vmatmul.mubr.f32.gmra.mrb[0].mxu0 %v595
        %v863 = vpop.f32.mrb[0].mxu0
        %v864 = vadd.f32 0.0, %v863
        %v865 = vpop.f32.mrb[0].mxu0
        %866 = vmatprep.mubr.f32.mxu0 %v600
        %867 = vmatmul.mubr.f32.gmra.mrb[0].mxu0 %v599
        %v868 = vpop.f32.mrb[0].mxu0
        %v869 = vadd.f32 0.0, %v868
        %v870 = vpop.f32.mrb[0].mxu0
        %871 = vmatprep.mubr.f32.mxu0 %v604
        %872 = vmatmul.mubr.f32.gmra.mrb[0].mxu0 %v603
        %v873 = vpop.f32.mrb[0].mxu0
        %v874 = vadd.f32 0.0, %v873
        %v875 = vpop.f32.mrb[0].mxu0
        %876 = vmatprep.mubr.f32.mxu0 %v608
        %877 = vmatmul.mubr.f32.gmra.mrb[0].mxu0 %v607
        %v878 = vpop.f32.mrb[0].mxu0
        %v879 = vadd.f32 0.0, %v878
        %v880 = vpop.f32.mrb[0].mxu0
        %881 = vmatprep.mubr.f32.mxu0 %v612
        %882 = vmatmul.mubr.f32.gmra.mrb[0].mxu0 %v611
        %v883 = vpop.f32.mrb[0].mxu0
        %v884 = vadd.f32 0.0, %v883
        %v885 = vpop.f32.mrb[0].mxu0
        %886 = vmatprep.mubr.f32.mxu0 %v616
        %887 = vmatmul.mubr.f32.gmra.mrb[0].mxu0 %v615
        %v888 = vpop.f32.mrb[0].mxu0
        %v889 = vadd.f32 0.0, %v888
        %v890 = vpop.f32.mrb[0].mxu0
        %891 = vmatprep.mubr.f32.mxu0 %v620
        %892 = vmatmul.mubr.f32.gmra.mrb[0].mxu0 %v619
        %v893 = vpop.f32.mrb[0].mxu0
        %v894 = vadd.f32 0.0, %v893
        %v895 = vpop.f32.mrb[0].mxu0
        %896 = vmatprep.mubr.f32.mxu0 %v624
        %897 = vmatmul.mubr.f32.gmra.mrb[0].mxu0 %v623
        %v898 = vpop.f32.mrb[0].mxu0
        %v899 = vadd.f32 0.0, %v898
        %v900 = vpop.f32.mrb[0].mxu0
        %901 = vmatprep.mubr.f32.mxu0 %v628
        %902 = vmatmul.mubr.f32.gmra.mrb[0].mxu0 %v627
        %v903 = vpop.f32.mrb[0].mxu0
        %v904 = vadd.f32 0.0, %v903
        %v905 = vpop.f32.mrb[0].mxu0
        %906 = vmatprep.mubr.f32.mxu0 %v632
        %907 = vmatmul.mubr.f32.gmra.mrb[0].mxu0 %v631
        %v908 = vpop.f32.mrb[0].mxu0
        %v909 = vadd.f32 0.0, %v908
        %v910 = vpop.f32.mrb[0].mxu0
        %911 = vmatprep.mubr.f32.mxu0 %v636
        %912 = vmatmul.mubr.f32.gmra.mrb[0].mxu0 %v635
        %v913 = vpop.f32.mrb[0].mxu0
        %v914 = vadd.f32 0.0, %v913
        %v915 = vpop.f32.mrb[0].mxu0
        %916 = vmatprep.mubr.f32.mxu0 %v640
        %917 = vmatmul.mubr.f32.gmra.mrb[0].mxu0 %v639
        %v918 = vpop.f32.mrb[0].mxu0
        %v919 = vadd.f32 0.0, %v918
        %v920 = vpop.f32.mrb[0].mxu0
        %921 = vmatprep.mubr.f32.mxu0 %v644
        %922 = vmatmul.mubr.f32.gmra.mrb[0].mxu0 %v643
        %v923 = vpop.f32.mrb[0].mxu0
        %v924 = vadd.f32 0.0, %v923
        %v925 = vpop.f32.mrb[0].mxu0
        %926 = vmatprep.mubr.f32.mxu0 %v648
        %927 = vmatmul.mubr.f32.gmra.mrb[0].mxu0 %v647
        %v928 = vpop.f32.mrb[0].mxu0
        %v929 = vadd.f32 0.0, %v928
        %v930 = vpop.f32.mrb[0].mxu0
        %931 = vmatprep.mubr.f32.mxu0 %v652
        %932 = vmatmul.mubr.f32.gmra.mrb[0].mxu0 %v651
        %v933 = vpop.f32.mrb[0].mxu0
        %v934 = vadd.f32 0.0, %v933
        %v935 = vpop.f32.mrb[0].mxu0
        %936 = vmatprep.mubr.f32.mxu0 %v656
        %937 = vmatmul.mubr.f32.gmra.mrb[0].mxu0 %v655
        %v938 = vpop.f32.mrb[0].mxu0
        %v939 = vadd.f32 0.0, %v938
        %v940 = vpop.f32.mrb[0].mxu0
        %941 = vmatprep.mubr.f32.mxu0 %v660
        %942 = vmatmul.mubr.f32.gmra.mrb[0].mxu0 %v659
        %v943 = vpop.f32.mrb[0].mxu0
        %v944 = vadd.f32 0.0, %v943
        %v945 = vpop.f32.mrb[0].mxu0
        %946 = vmatprep.mubr.f32.mxu0 %v664
        %947 = vmatmul.mubr.f32.gmra.mrb[0].mxu0 %v663
        %v948 = vpop.f32.mrb[0].mxu0
        %v949 = vadd.f32 0.0, %v948
        %v950 = vpop.f32.mrb[0].mxu0
        %951 = vmatprep.mubr.f32.mxu0 %v668
        %952 = vmatmul.mubr.f32.gmra.mrb[0].mxu0 %v667
        %v953 = vpop.f32.mrb[0].mxu0
        %v954 = vadd.f32 0.0, %v953
        %v955 = vpop.f32.mrb[0].mxu0
        %956 = vmatprep.mubr.f32.mxu0 %v672
        %957 = vmatmul.mubr.f32.gmra.mrb[0].mxu0 %v671
        %v958 = vpop.f32.mrb[0].mxu0
        %v959 = vadd.f32 0.0, %v958
        %v960 = vpop.f32.mrb[0].mxu0
        %961 = vmatprep.mubr.f32.mxu0 %v676
        %962 = vmatmul.mubr.f32.gmra.mrb[0].mxu0 %v675
        %v963 = vpop.f32.mrb[0].mxu0
        %v964 = vadd.f32 0.0, %v963
        %v965 = vpop.f32.mrb[0].mxu0
        %966 = vmatprep.mubr.f32.mxu0 %v680
        %967 = vmatmul.mubr.f32.gmra.mrb[0].mxu0 %v679
        %v968 = vpop.f32.mrb[0].mxu0
        %v969 = vadd.f32 0.0, %v968
        %v970 = vpop.f32.mrb[0].mxu0
        %971 = vdwg.mxu0
        %972 = vmatprep.subr.mxu0 0.0
        %973 = vmatpush1.msra.mxu0 %v715
        %974 = vmatprep.subr.mxu0 0.0
        %975 = vmatpush1.msra.mxu0 %v716
        %976 = vmatprep.subr.mxu0 0.0
        %977 = vmatpush1.msra.mxu0 %v717
        %978 = vmatprep.subr.mxu0 0.0
        %979 = vmatpush1.msra.mxu0 %v718
        %980 = vmatprep.subr.mxu0 0.0
        %981 = vmatpush1.msra.mxu0 %v719
        %982 = vmatprep.subr.mxu0 0.0
        %983 = vmatpush1.msra.mxu0 %v720
        %984 = vmatprep.subr.mxu0 0.0
        %985 = vmatpush1.msra.mxu0 %v721
        %986 = vmatprep.subr.mxu0 0.0
        %987 = vmatpush1.msra.mxu0 %v722
        %988 = vmatprep.subr.mxu0 0.0
        %989 = vmatpush1.msra.mxu0 %v723
        %990 = vmatprep.subr.mxu0 0.0
        %991 = vmatpush1.msra.mxu0 %v724
        %992 = vmatprep.subr.mxu0 0.0
        %993 = vmatpush1.msra.mxu0 %v725
        %994 = vmatprep.subr.mxu0 0.0
        %995 = vmatpush1.msra.mxu0 %v726
        %996 = vmatprep.subr.mxu0 0.0
        %997 = vmatpush1.msra.mxu0 %v727
        %998 = vmatprep.subr.mxu0 0.0
        %999 = vmatpush1.msra.mxu0 %v728
        %1000 = vmatprep.subr.mxu0 0.0
        %1001 = vmatpush1.msra.mxu0 %v729
        %1002 = vmatprep.subr.mxu0 0.0
        %1003 = vmatpush1.msra.mxu0 %v730
        %1004 = vmatprep.subr.mxu0 0.0
        %1005 = vmatpush1.msra.mxu0 %v731
        %1006 = vmatprep.subr.mxu0 0.0
        %1007 = vmatpush1.msra.mxu0 %v732
        %1008 = vmatprep.subr.mxu0 0.0
        %1009 = vmatpush1.msra.mxu0 %v733
        %1010 = vmatprep.subr.mxu0 0.0
        %1011 = vmatpush1.msra.mxu0 %v734
        %1012 = vmatprep.subr.mxu0 0.0
        %1013 = vmatpush1.msra.mxu0 %v735
        %1014 = vmatprep.subr.mxu0 0.0
        %1015 = vmatpush1.msra.mxu0 %v736
        %1016 = vmatprep.subr.mxu0 0.0
        %1017 = vmatpush1.msra.mxu0 %v737
        %1018 = vmatprep.subr.mxu0 0.0
        %1019 = vmatpush1.msra.mxu0 %v738
        %1020 = vmatprep.subr.mxu0 0.0
        %1021 = vmatpush1.msra.mxu0 %v739
        %1022 = vmatprep.subr.mxu0 0.0
        %1023 = vmatpush1.msra.mxu0 %v740
        %1024 = vmatprep.subr.mxu0 0.0
        %1025 = vmatpush1.msra.mxu0 %v741
        %1026 = vmatprep.subr.mxu0 0.0
        %1027 = vmatpush1.msra.mxu0 %v742
        %1028 = vmatprep.subr.mxu0 0.0
        %1029 = vmatpush1.msra.mxu0 %v743
        %1030 = vmatprep.subr.mxu0 0.0
        %1031 = vmatpush1.msra.mxu0 %v744
        %1032 = vmatprep.subr.mxu0 0.0
        %1033 = vmatpush1.msra.mxu0 %v745
        %1034 = vmatprep.subr.mxu0 0.0
        %1035 = vmatpush1.msra.mxu0 %v746
        %1036 = vmatprep.mubr.f32.mxu0 %v558
        %1037 = vmatmul.mubr.f32.gmra.mrb[0].mxu0 %v557
        %v1038 = vpop.f32.mrb[0].mxu0
        %v1039 = vadd.f32 %v814, %v1038
        %v1040 = vpop.f32.mrb[0].mxu0
        %1041 = vmatprep.mubr.f32.mxu0 %v562
        %1042 = vmatmul.mubr.f32.gmra.mrb[0].mxu0 %v561
        %v1043 = vpop.f32.mrb[0].mxu0
        %v1044 = vadd.f32 %v819, %v1043
        %v1045 = vpop.f32.mrb[0].mxu0
        %1046 = vmatprep.mubr.f32.mxu0 %v566
        %1047 = vmatmul.mubr.f32.gmra.mrb[0].mxu0 %v565
        %v1048 = vpop.f32.mrb[0].mxu0
        %v1049 = vadd.f32 %v824, %v1048
        %v1050 = vpop.f32.mrb[0].mxu0
        %1051 = vmatprep.mubr.f32.mxu0 %v570
        %1052 = vmatmul.mubr.f32.gmra.mrb[0].mxu0 %v569
        %v1053 = vpop.f32.mrb[0].mxu0
        %v1054 = vadd.f32 %v829, %v1053
        %v1055 = vpop.f32.mrb[0].mxu0
        %1056 = vmatprep.mubr.f32.mxu0 %v574
        %1057 = vmatmul.mubr.f32.gmra.mrb[0].mxu0 %v573
        %v1058 = vpop.f32.mrb[0].mxu0
        %v1059 = vadd.f32 %v834, %v1058
        %v1060 = vpop.f32.mrb[0].mxu0
        %1061 = vmatprep.mubr.f32.mxu0 %v578
        %1062 = vmatmul.mubr.f32.gmra.mrb[0].mxu0 %v577
        %v1063 = vpop.f32.mrb[0].mxu0
        %v1064 = vadd.f32 %v839, %v1063
        %v1065 = vpop.f32.mrb[0].mxu0
        %1066 = vmatprep.mubr.f32.mxu0 %v582
        %1067 = vmatmul.mubr.f32.gmra.mrb[0].mxu0 %v581
        %v1068 = vpop.f32.mrb[0].mxu0
        %v1069 = vadd.f32 %v844, %v1068
        %v1070 = vpop.f32.mrb[0].mxu0
        %1071 = vmatprep.mubr.f32.mxu0 %v586
        %1072 = vmatmul.mubr.f32.gmra.mrb[0].mxu0 %v585
        %v1073 = vpop.f32.mrb[0].mxu0
        %v1074 = vadd.f32 %v849, %v1073
        %v1075 = vpop.f32.mrb[0].mxu0
        %1076 = vmatprep.mubr.f32.mxu0 %v590
        %1077 = vmatmul.mubr.f32.gmra.mrb[0].mxu0 %v589
        %v1078 = vpop.f32.mrb[0].mxu0
        %v1079 = vadd.f32 %v854, %v1078
        %v1080 = vpop.f32.mrb[0].mxu0
        %1081 = vmatprep.mubr.f32.mxu0 %v594
        %1082 = vmatmul.mubr.f32.gmra.mrb[0].mxu0 %v593
        %v1083 = vpop.f32.mrb[0].mxu0
        %v1084 = vadd.f32 %v859, %v1083
        %v1085 = vpop.f32.mrb[0].mxu0
        %1086 = vmatprep.mubr.f32.mxu0 %v598
        %1087 = vmatmul.mubr.f32.gmra.mrb[0].mxu0 %v597
        %v1088 = vpop.f32.mrb[0].mxu0
        %v1089 = vadd.f32 %v864, %v1088
        %v1090 = vpop.f32.mrb[0].mxu0
        %1091 = vmatprep.mubr.f32.mxu0 %v602
        %1092 = vmatmul.mubr.f32.gmra.mrb[0].mxu0 %v601
        %v1093 = vpop.f32.mrb[0].mxu0
        %v1094 = vadd.f32 %v869, %v1093
        %v1095 = vpop.f32.mrb[0].mxu0
        %1096 = vmatprep.mubr.f32.mxu0 %v606
        %1097 = vmatmul.mubr.f32.gmra.mrb[0].mxu0 %v605
        %v1098 = vpop.f32.mrb[0].mxu0
        %v1099 = vadd.f32 %v874, %v1098
        %v1100 = vpop.f32.mrb[0].mxu0
        %1101 = vmatprep.mubr.f32.mxu0 %v610
        %1102 = vmatmul.mubr.f32.gmra.mrb[0].mxu0 %v609
        %v1103 = vpop.f32.mrb[0].mxu0
        %v1104 = vadd.f32 %v879, %v1103
        %v1105 = vpop.f32.mrb[0].mxu0
        %1106 = vmatprep.mubr.f32.mxu0 %v614
        %1107 = vmatmul.mubr.f32.gmra.mrb[0].mxu0 %v613
        %v1108 = vpop.f32.mrb[0].mxu0
        %v1109 = vadd.f32 %v884, %v1108
        %v1110 = vpop.f32.mrb[0].mxu0
        %1111 = vmatprep.mubr.f32.mxu0 %v618
        %1112 = vmatmul.mubr.f32.gmra.mrb[0].mxu0 %v617
        %v1113 = vpop.f32.mrb[0].mxu0
        %v1114 = vadd.f32 %v889, %v1113
        %v1115 = vpop.f32.mrb[0].mxu0
        %1116 = vmatprep.mubr.f32.mxu0 %v622
        %1117 = vmatmul.mubr.f32.gmra.mrb[0].mxu0 %v621
        %v1118 = vpop.f32.mrb[0].mxu0
        %v1119 = vadd.f32 %v894, %v1118
        %v1120 = vpop.f32.mrb[0].mxu0
        %1121 = vmatprep.mubr.f32.mxu0 %v626
        %1122 = vmatmul.mubr.f32.gmra.mrb[0].mxu0 %v625
        %v1123 = vpop.f32.mrb[0].mxu0
        %v1124 = vadd.f32 %v899, %v1123
        %v1125 = vpop.f32.mrb[0].mxu0
        %1126 = vmatprep.mubr.f32.mxu0 %v630
        %1127 = vmatmul.mubr.f32.gmra.mrb[0].mxu0 %v629
        %v1128 = vpop.f32.mrb[0].mxu0
        %v1129 = vadd.f32 %v904, %v1128
        %v1130 = vpop.f32.mrb[0].mxu0
        %1131 = vmatprep.mubr.f32.mxu0 %v634
        %1132 = vmatmul.mubr.f32.gmra.mrb[0].mxu0 %v633
        %v1133 = vpop.f32.mrb[0].mxu0
        %v1134 = vadd.f32 %v909, %v1133
        %v1135 = vpop.f32.mrb[0].mxu0
        %1136 = vmatprep.mubr.f32.mxu0 %v638
        %1137 = vmatmul.mubr.f32.gmra.mrb[0].mxu0 %v637
        %v1138 = vpop.f32.mrb[0].mxu0
        %v1139 = vadd.f32 %v914, %v1138
        %v1140 = vpop.f32.mrb[0].mxu0
        %1141 = vmatprep.mubr.f32.mxu0 %v642
        %1142 = vmatmul.mubr.f32.gmra.mrb[0].mxu0 %v641
        %v1143 = vpop.f32.mrb[0].mxu0
        %v1144 = vadd.f32 %v919, %v1143
        %v1145 = vpop.f32.mrb[0].mxu0
        %1146 = vmatprep.mubr.f32.mxu0 %v646
        %1147 = vmatmul.mubr.f32.gmra.mrb[0].mxu0 %v645
        %v1148 = vpop.f32.mrb[0].mxu0
        %v1149 = vadd.f32 %v924, %v1148
        %v1150 = vpop.f32.mrb[0].mxu0
        %1151 = vmatprep.mubr.f32.mxu0 %v650
        %1152 = vmatmul.mubr.f32.gmra.mrb[0].mxu0 %v649
        %v1153 = vpop.f32.mrb[0].mxu0
        %v1154 = vadd.f32 %v929, %v1153
        %v1155 = vpop.f32.mrb[0].mxu0
        %1156 = vmatprep.mubr.f32.mxu0 %v654
        %1157 = vmatmul.mubr.f32.gmra.mrb[0].mxu0 %v653
        %v1158 = vpop.f32.mrb[0].mxu0
        %v1159 = vadd.f32 %v934, %v1158
        %v1160 = vpop.f32.mrb[0].mxu0
        %1161 = vmatprep.mubr.f32.mxu0 %v658
        %1162 = vmatmul.mubr.f32.gmra.mrb[0].mxu0 %v657
        %v1163 = vpop.f32.mrb[0].mxu0
        %v1164 = vadd.f32 %v939, %v1163
        %v1165 = vpop.f32.mrb[0].mxu0
        %1166 = vmatprep.mubr.f32.mxu0 %v662
        %1167 = vmatmul.mubr.f32.gmra.mrb[0].mxu0 %v661
        %v1168 = vpop.f32.mrb[0].mxu0
        %v1169 = vadd.f32 %v944, %v1168
        %v1170 = vpop.f32.mrb[0].mxu0
        %1171 = vmatprep.mubr.f32.mxu0 %v666
        %1172 = vmatmul.mubr.f32.gmra.mrb[0].mxu0 %v665
        %v1173 = vpop.f32.mrb[0].mxu0
        %v1174 = vadd.f32 %v949, %v1173
        %v1175 = vpop.f32.mrb[0].mxu0
        %1176 = vmatprep.mubr.f32.mxu0 %v670
        %1177 = vmatmul.mubr.f32.gmra.mrb[0].mxu0 %v669
        %v1178 = vpop.f32.mrb[0].mxu0
        %v1179 = vadd.f32 %v954, %v1178
        %v1180 = vpop.f32.mrb[0].mxu0
        %1181 = vmatprep.mubr.f32.mxu0 %v674
        %1182 = vmatmul.mubr.f32.gmra.mrb[0].mxu0 %v673
        %v1183 = vpop.f32.mrb[0].mxu0
        %v1184 = vadd.f32 %v959, %v1183
        %v1185 = vpop.f32.mrb[0].mxu0
        %1186 = vmatprep.mubr.f32.mxu0 %v678
        %1187 = vmatmul.mubr.f32.gmra.mrb[0].mxu0 %v677
        %v1188 = vpop.f32.mrb[0].mxu0
        %v1189 = vadd.f32 %v964, %v1188
        %v1190 = vpop.f32.mrb[0].mxu0
        %1191 = vmatprep.mubr.f32.mxu0 %v682
        %1192 = vmatmul.mubr.f32.gmra.mrb[0].mxu0 %v681
        %v1193 = vpop.f32.mrb[0].mxu0
        %v1194 = vadd.f32 %v969, %v1193
        %v1195 = vpop.f32.mrb[0].mxu0
        %1196 = vdwg.mxu0
        %v1197 = vadd.f32 %v523, %v1039
        %v1198 = vadd.f32 %v524, %v1044
        %v1199 = vadd.f32 %v525, %v1049
        %v1200 = vadd.f32 %v526, %v1054
        %v1201 = vadd.f32 %v527, %v1059
        %v1202 = vadd.f32 %v528, %v1064
        %v1203 = vadd.f32 %v529, %v1069
        %v1204 = vadd.f32 %v530, %v1074
        %v1205 = vadd.f32 %v531, %v1079
        %v1206 = vadd.f32 %v532, %v1084
        %v1207 = vadd.f32 %v533, %v1089
        %v1208 = vadd.f32 %v534, %v1094
        %v1209 = vadd.f32 %v535, %v1099
        %v1210 = vadd.f32 %v536, %v1104
        %v1211 = vadd.f32 %v537, %v1109
        %v1212 = vadd.f32 %v538, %v1114
        %v1213 = vadd.f32 %v539, %v1119
        %v1214 = vadd.f32 %v540, %v1124
        %v1215 = vadd.f32 %v541, %v1129
        %v1216 = vadd.f32 %v542, %v1134
        %v1217 = vadd.f32 %v543, %v1139
        %v1218 = vadd.f32 %v544, %v1144
        %v1219 = vadd.f32 %v545, %v1149
        %v1220 = vadd.f32 %v546, %v1154
        %v1221 = vadd.f32 %v547, %v1159
        %v1222 = vadd.f32 %v548, %v1164
        %v1223 = vadd.f32 %v549, %v1169
        %v1224 = vadd.f32 %v550, %v1174
        %v1225 = vadd.f32 %v551, %v1179
        %v1226 = vadd.f32 %v552, %v1184
        %v1227 = vadd.f32 %v553, %v1189
        %v1228 = vadd.f32 %v554, %v1194
        %vm1229 = vcmask 64512
        %1230 = vst.msk [vmem:[#allocation2] sm:$0xff] %vm1229, %v1197
        %1231 = vst.msk [vmem:[#allocation2 + $0x8] sm:$0xff] %vm1229, %v1198
        %1232 = vst.msk [vmem:[#allocation2 + $0x10] sm:$0xff] %vm1229, %v1199
        %1233 = vst.msk [vmem:[#allocation2 + $0x18] sm:$0xff] %vm1229, %v1200
        %1234 = vst.msk [vmem:[#allocation2 + $0x20] sm:$0xff] %vm1229, %v1201
        %1235 = vst.msk [vmem:[#allocation2 + $0x28] sm:$0xff] %vm1229, %v1202
        %1236 = vst.msk [vmem:[#allocation2 + $0x30] sm:$0xff] %vm1229, %v1203
        %1237 = vst.msk [vmem:[#allocation2 + $0x38] sm:$0xff] %vm1229, %v1204
        %1238 = vst.msk [vmem:[#allocation2 + $0x40] sm:$0xff] %vm1229, %v1205
        %1239 = vst.msk [vmem:[#allocation2 + $0x48] sm:$0xff] %vm1229, %v1206
        %1240 = vst.msk [vmem:[#allocation2 + $0x50] sm:$0xff] %vm1229, %v1207
        %1241 = vst.msk [vmem:[#allocation2 + $0x58] sm:$0xff] %vm1229, %v1208
        %1242 = vst.msk [vmem:[#allocation2 + $0x60] sm:$0xff] %vm1229, %v1209
        %1243 = vst.msk [vmem:[#allocation2 + $0x68] sm:$0xff] %vm1229, %v1210
        %1244 = vst.msk [vmem:[#allocation2 + $0x70] sm:$0xff] %vm1229, %v1211
        %1245 = vst.msk [vmem:[#allocation2 + $0x78] sm:$0xff] %vm1229, %v1212
        %1246 = vst.msk [vmem:[#allocation2 + $0x80] sm:$0xff] %vm1229, %v1213
        %1247 = vst.msk [vmem:[#allocation2 + $0x88] sm:$0xff] %vm1229, %v1214
        %1248 = vst.msk [vmem:[#allocation2 + $0x90] sm:$0xff] %vm1229, %v1215
        %1249 = vst.msk [vmem:[#allocation2 + $0x98] sm:$0xff] %vm1229, %v1216
        %1250 = vst.msk [vmem:[#allocation2 + $0xa0] sm:$0xff] %vm1229, %v1217
        %1251 = vst.msk [vmem:[#allocation2 + $0xa8] sm:$0xff] %vm1229, %v1218
        %1252 = vst.msk [vmem:[#allocation2 + $0xb0] sm:$0xff] %vm1229, %v1219
        %1253 = vst.msk [vmem:[#allocation2 + $0xb8] sm:$0xff] %vm1229, %v1220
        %1254 = vst.msk [vmem:[#allocation2 + $0xc0] sm:$0xff] %vm1229, %v1221
        %1255 = vst.msk [vmem:[#allocation2 + $0xc8] sm:$0xff] %vm1229, %v1222
        %1256 = vst.msk [vmem:[#allocation2 + $0xd0] sm:$0xff] %vm1229, %v1223
        %1257 = vst.msk [vmem:[#allocation2 + $0xd8] sm:$0xff] %vm1229, %v1224
        %1258 = vst.msk [vmem:[#allocation2 + $0xe0] sm:$0xff] %vm1229, %v1225
        %1259 = vst.msk [vmem:[#allocation2 + $0xe8] sm:$0xff] %vm1229, %v1226
        %1260 = vst.msk [vmem:[#allocation2 + $0xf0] sm:$0xff] %vm1229, %v1227
        %1261 = vst.msk [vmem:[#allocation2 + $0xf8] sm:$0xff] %vm1229, %v1228
        %p1262 = scmp.eq.s32.totalorder %s20, 1
        // Predicated region
        $region56: #{spiral_pool.1} parent=46 // pred_check
          %p1263 = pneg %p1262
        $region57: #{spiral_pool.1} parent=46 // pred_check_branch
          %1265 = sbr.rel (%p1263) target = $region59
        $region58: #{spiral_pool.1} parent=46 // pred_region
          %v1266 = vld [vmem:[#allocation2] sm:$0xff]
          %v1267 = vld [vmem:[#allocation2 + $0x8] sm:$0xff]
          %v1268 = vld [vmem:[#allocation2 + $0x10] sm:$0xff]
          %v1269 = vld [vmem:[#allocation2 + $0x18] sm:$0xff]
          %v1270 = vld [vmem:[#allocation2 + $0x20] sm:$0xff]
          %v1271 = vld [vmem:[#allocation2 + $0x28] sm:$0xff]
          %v1272 = vld [vmem:[#allocation2 + $0x30] sm:$0xff]
          %v1273 = vld [vmem:[#allocation2 + $0x38] sm:$0xff]
          %v1274 = vld [vmem:[#allocation2 + $0x40] sm:$0xff]
          %v1275 = vld [vmem:[#allocation2 + $0x48] sm:$0xff]
          %v1276 = vld [vmem:[#allocation2 + $0x50] sm:$0xff]
          %v1277 = vld [vmem:[#allocation2 + $0x58] sm:$0xff]
          %v1278 = vld [vmem:[#allocation2 + $0x60] sm:$0xff]
          %v1279 = vld [vmem:[#allocation2 + $0x68] sm:$0xff]
          %v1280 = vld [vmem:[#allocation2 + $0x70] sm:$0xff]
          %v1281 = vld [vmem:[#allocation2 + $0x78] sm:$0xff]
          %v1282 = vld [vmem:[#allocation2 + $0x80] sm:$0xff]
          %v1283 = vld [vmem:[#allocation2 + $0x88] sm:$0xff]
          %v1284 = vld [vmem:[#allocation2 + $0x90] sm:$0xff]
          %v1285 = vld [vmem:[#allocation2 + $0x98] sm:$0xff]
          %v1286 = vld [vmem:[#allocation2 + $0xa0] sm:$0xff]
          %v1287 = vld [vmem:[#allocation2 + $0xa8] sm:$0xff]
          %v1288 = vld [vmem:[#allocation2 + $0xb0] sm:$0xff]
          %v1289 = vld [vmem:[#allocation2 + $0xb8] sm:$0xff]
          %v1290 = vld [vmem:[#allocation2 + $0xc0] sm:$0xff]
          %v1291 = vld [vmem:[#allocation2 + $0xc8] sm:$0xff]
          %v1292 = vld [vmem:[#allocation2 + $0xd0] sm:$0xff]
          %v1293 = vld [vmem:[#allocation2 + $0xd8] sm:$0xff]
          %v1294 = vld [vmem:[#allocation2 + $0xe0] sm:$0xff]
          %v1295 = vld [vmem:[#allocation2 + $0xe8] sm:$0xff]
          %v1296 = vld [vmem:[#allocation2 + $0xf0] sm:$0xff]
          %v1297 = vld [vmem:[#allocation2 + $0xf8] sm:$0xff]
          %1298 = vst.msk [vmem:[%s484] sm:$0xff] %vm1229, %v1266
          %1299 = vst.msk [vmem:[%s484 + $0x8] sm:$0xff] %vm1229, %v1267
          %1300 = vst.msk [vmem:[%s484 + $0x10] sm:$0xff] %vm1229, %v1268
          %1301 = vst.msk [vmem:[%s484 + $0x18] sm:$0xff] %vm1229, %v1269
          %1302 = vst.msk [vmem:[%s484 + $0x20] sm:$0xff] %vm1229, %v1270
          %1303 = vst.msk [vmem:[%s484 + $0x28] sm:$0xff] %vm1229, %v1271
          %1304 = vst.msk [vmem:[%s484 + $0x30] sm:$0xff] %vm1229, %v1272
          %1305 = vst.msk [vmem:[%s484 + $0x38] sm:$0xff] %vm1229, %v1273
          %1306 = vst.msk [vmem:[%s484 + $0x40] sm:$0xff] %vm1229, %v1274
          %1307 = vst.msk [vmem:[%s484 + $0x48] sm:$0xff] %vm1229, %v1275
          %1308 = vst.msk [vmem:[%s484 + $0x50] sm:$0xff] %vm1229, %v1276
          %1309 = vst.msk [vmem:[%s484 + $0x58] sm:$0xff] %vm1229, %v1277
          %1310 = vst.msk [vmem:[%s484 + $0x60] sm:$0xff] %vm1229, %v1278
          %1311 = vst.msk [vmem:[%s484 + $0x68] sm:$0xff] %vm1229, %v1279
          %1312 = vst.msk [vmem:[%s484 + $0x70] sm:$0xff] %vm1229, %v1280
          %1313 = vst.msk [vmem:[%s484 + $0x78] sm:$0xff] %vm1229, %v1281
          %1314 = vst.msk [vmem:[%s484 + $0x80] sm:$0xff] %vm1229, %v1282
          %1315 = vst.msk [vmem:[%s484 + $0x88] sm:$0xff] %vm1229, %v1283
          %1316 = vst.msk [vmem:[%s484 + $0x90] sm:$0xff] %vm1229, %v1284
          %1317 = vst.msk [vmem:[%s484 + $0x98] sm:$0xff] %vm1229, %v1285
          %1318 = vst.msk [vmem:[%s484 + $0xa0] sm:$0xff] %vm1229, %v1286
          %1319 = vst.msk [vmem:[%s484 + $0xa8] sm:$0xff] %vm1229, %v1287
          %1320 = vst.msk [vmem:[%s484 + $0xb0] sm:$0xff] %vm1229, %v1288
          %1321 = vst.msk [vmem:[%s484 + $0xb8] sm:$0xff] %vm1229, %v1289
          %1322 = vst.msk [vmem:[%s484 + $0xc0] sm:$0xff] %vm1229, %v1290
          %1323 = vst.msk [vmem:[%s484 + $0xc8] sm:$0xff] %vm1229, %v1291
          %1324 = vst.msk [vmem:[%s484 + $0xd0] sm:$0xff] %vm1229, %v1292
          %1325 = vst.msk [vmem:[%s484 + $0xd8] sm:$0xff] %vm1229, %v1293
          %1326 = vst.msk [vmem:[%s484 + $0xe0] sm:$0xff] %vm1229, %v1294
          %1327 = vst.msk [vmem:[%s484 + $0xe8] sm:$0xff] %vm1229, %v1295
          %1328 = vst.msk [vmem:[%s484 + $0xf0] sm:$0xff] %vm1229, %v1296
          %1329 = vst.msk [vmem:[%s484 + $0xf8] sm:$0xff] %vm1229, %v1297
        $region59: #{spiral_pool.1} parent=46 // pred_fallthru
          _
        %s1330 = smul.u32 32, %s18
        %p1331 = scmp.lt.s32.totalorder %s1330, 63
        %s1332 = scalar_select %p1331, %s1330, 63
        %p1333 = scmp.lt.s32.totalorder %s19, 0
        %s1334 = scalar_select %p1333, %s19, 0
        %s1335 = sadd.s32 %s1334, %s1332
        %s1336 = smul.addr %s1335, 8
        %s1337 = scalar_lea.vmem %s2, %s1336
        // Predicated region
        $region60: #{spiral_pool.1} parent=46 // pred_check
          %p1338 = pneg %p108
        $region61: #{spiral_pool.1} parent=46 // pred_check_branch
          %1340 = sbr.rel (%p1338) target = $region63
        $region62: #{spiral_pool.1} parent=46 // pred_region
          %s1341 = smul.u32 32, %s18
        $region63: #{spiral_pool.1} parent=46 // pred_fallthru
          _
      $region47: #{spiral_pool.1} parent=5 // pred_fallthru
        _
      %p1342 = scmp.le.s32.totalorder 2, %s8
      // Predicated region
      $region64: #{spiral_pool.1} parent=5 // pred_check
        %p1343 = pneg %p1342
      $region65: #{spiral_pool.1} parent=5 // pred_check_branch
        %1345 = sbr.rel (%p1343) target = $region67
      $region66: #{spiral_pool.1} parent=5 // pred_region
        %s1346 = ssub.s32 %s8, 2
        // Predicated region
        $region68: #{spiral_pool.1} parent=66 // pred_check
          %p1347 = pneg %p114
        $region69: #{spiral_pool.1} parent=66 // pred_check_branch
          %1349 = sbr.rel (%p1347) target = $region71
        $region70: #{spiral_pool.1} parent=66 // pred_region
          %s1350 = smul.u32 32, %s21
          %p1351 = scmp.lt.s32.totalorder %s1350, 63
          %s1352 = scalar_select %p1351, %s1350, 63
          %p1353 = scmp.lt.s32.totalorder %s22, 0
          %s1354 = scalar_select %p1353, %s22, 0
          %s1355 = sadd.s32 %s1354, %s1352
          %s1356 = smul.addr %s1355, 8
          %s1357 = scalar_lea.vmem %s2, %s1356
        $region71: #{spiral_pool.1} parent=66 // pred_fallthru
          _
      $region67: #{spiral_pool.1} parent=5 // pred_fallthru
        _
    $region6: #{spiral_pool.1} parent=1 // loop_footer
      %s12 = sadd.s32 1, %s8
    $region7: #{spiral_pool.1} parent=1 // loop_footer_branch
      %7 = sbr.rel target = $region3
    $region8: #{spiral_pool.1} parent=1 // loop_exit
      _

</llo_original>
